<compile_context>
chip_gen: v7x
topology: tpu7x:2x2x1
jax: 0.10.0
libtpu: 0.0.40
codegen_flags: <defaults>
</compile_context>

<pallas_src>
import functools

import jax
import jax.numpy as jnp
from jax import lax
from jax.experimental import pallas as pl
from jax.experimental.pallas import tpu as pltpu

_BN_EPS = 1e-5
LANE = 128

# ----------------------------- model config (small) -------------------------
IMG_H = 64
ROI_OUT = (2, 2)
HIDDEN = 32
N_CLASSES = 5
CONTEXT_SIZE = 2  # context_indices has 2*CONTEXT_SIZE columns
# scaled-down AlexNet features[:7]:  (Cin, Cout, K, stride, pad, relu, maxpool_after)
CONV_CFG = [
    (3, 8, 11, 4, 2, True, True),
    (8, 16, 5, 1, 2, True, True),
    (16, 16, 3, 1, 1, False, False),
]
N_VISUAL = CONV_CFG[-1][1] * ROI_OUT[0] * ROI_OUT[1]       # 16*2*2 = 64
N_TOTAL = N_VISUAL + HIDDEN + 4                            # visual + context + bbox feats

_VMEM = pltpu.MemorySpace.VMEM
_VMEM_LIMIT = 32 * 1024 * 1024


def _round_up(x, m):
    return (x + m - 1) // m * m


def _pad2(x, rows, cols):
    return jnp.pad(x, ((0, rows - x.shape[0]), (0, cols - x.shape[1])))


# ------------------------------ conv matmul kernel ---------------------------
def _conv_mm_kernel(x_ref, w_ref, b_ref, o_ref, *, relu):
    acc = jnp.dot(x_ref[...], w_ref[...], preferred_element_type=jnp.float32)
    acc = acc + b_ref[...]
    if relu:
        acc = jnp.maximum(acc, 0.0)
    o_ref[...] = acc                                      # lane-dense [block_m, 128] store


def conv_matmul(patches, w_t, b, relu):
    """[M, Kp](bf16) @ [Kp, 128](bf16) + b(f32), M-gridded, f32 lane-dense output."""
    M, Kp = patches.shape
    NP = w_t.shape[1]
    block_m = 256 if M > 256 else _round_up(M, 8)
    m_pad = _round_up(M, block_m)
    if m_pad != M:
        patches = jnp.pad(patches, ((0, m_pad - M), (0, 0)))
    out = pl.pallas_call(
        functools.partial(_conv_mm_kernel, relu=relu),
        out_shape=jax.ShapeDtypeStruct((m_pad, NP), jnp.float32),
        grid_spec=pltpu.PrefetchScalarGridSpec(
            num_scalar_prefetch=0,
            grid=(m_pad // block_m,),
            in_specs=[pl.BlockSpec((block_m, Kp), lambda i: (i, 0)),
                      pl.BlockSpec((Kp, NP), lambda i: (0, 0)),
                      pl.BlockSpec((1, NP), lambda i: (0, 0))],
            out_specs=pl.BlockSpec((block_m, NP), lambda i: (i, 0))),
        compiler_params=pltpu.CompilerParams(
            dimension_semantics=("parallel",),
            vmem_limit_bytes=_VMEM_LIMIT),
    )(patches, w_t, b)
    return out[:M]


def conv2d(x, w_t, b, k, stride, pad, relu, cout):
    """NCHW conv via im2col (glue) + gridded Pallas bf16 MXU matmul (hot path)."""
    # TODO(synk): im2col patch extraction stays in plain JAX; fusing the (kh,kw)
    # gather into the Pallas matmul index_map would remove this HBM round-trip.
    N, C, H, W = x.shape
    xp = jnp.pad(x, ((0, 0), (0, 0), (pad, pad), (pad, pad)))
    Hp, Wp = H + 2 * pad, W + 2 * pad
    OH = (Hp - k) // stride + 1
    OW = (Wp - k) // stride + 1
    cols = []
    for i in range(k):
        for j in range(k):
            cols.append(lax.slice(
                xp, (0, 0, i, j),
                (N, C, i + stride * (OH - 1) + 1, j + stride * (OW - 1) + 1),
                (1, 1, stride, stride)))
    patches = jnp.stack(cols, axis=2).reshape(N, C * k * k, OH, OW)
    patches = patches.transpose(0, 2, 3, 1).reshape(N * OH * OW, C * k * k)
    kp = w_t.shape[0]                                     # K padded to multiple of 128
    patches = jnp.pad(patches, ((0, 0), (0, kp - C * k * k))).astype(jnp.bfloat16)
    out = conv_matmul(patches, w_t, b, relu)[:, :cout]
    return out.reshape(N, OH, OW, cout).transpose(0, 3, 1, 2)


def max_pool2d(x, ksize, stride):
    # TODO(synk): 3x3/stride-2 maxpool kept in plain JAX (reduce_window) glue.
    return lax.reduce_window(x, -jnp.inf, lax.max,
                             (1, 1, ksize, ksize), (1, 1, stride, stride), 'VALID')


def roi_pool(feat, boxes, output_size, spatial_scale):
    """torchvision.ops.RoIPool semantics (data-dependent bin gather+max)."""
    # TODO(synk): RoIPool is a data-dependent gather; a PrefetchScalarGridSpec
    # Pallas kernel would avoid the mask broadcast at large feature-map sizes.
    N, C, H, W = feat.shape
    ph, pw = output_size
    batch_idx = boxes[:, 0].astype(jnp.int32)
    x1 = jnp.round(boxes[:, 1] * spatial_scale).astype(jnp.int32)
    y1 = jnp.round(boxes[:, 2] * spatial_scale).astype(jnp.int32)
    x2 = jnp.round(boxes[:, 3] * spatial_scale).astype(jnp.int32)
    y2 = jnp.round(boxes[:, 4] * spatial_scale).astype(jnp.int32)
    roi_w = jnp.maximum(x2 - x1 + 1, 1).astype(jnp.float32)
    roi_h = jnp.maximum(y2 - y1 + 1, 1).astype(jnp.float32)
    bin_h = roi_h / ph
    bin_w = roi_w / pw
    ph_i = jnp.arange(ph, dtype=jnp.float32)
    pw_i = jnp.arange(pw, dtype=jnp.float32)
    hstart = jnp.floor(ph_i[None, :] * bin_h[:, None]).astype(jnp.int32) + y1[:, None]
    hend = jnp.ceil((ph_i[None, :] + 1.0) * bin_h[:, None]).astype(jnp.int32) + y1[:, None]
    wstart = jnp.floor(pw_i[None, :] * bin_w[:, None]).astype(jnp.int32) + x1[:, None]
    wend = jnp.ceil((pw_i[None, :] + 1.0) * bin_w[:, None]).astype(jnp.int32) + x1[:, None]
    hstart = jnp.clip(hstart, 0, H); hend = jnp.clip(hend, 0, H)
    wstart = jnp.clip(wstart, 0, W); wend = jnp.clip(wend, 0, W)
    hh = jnp.arange(H)
    ww = jnp.arange(W)
    hmask = (hh[None, None, :] >= hstart[:, :, None]) & (hh[None, None, :] < hend[:, :, None])
    wmask = (ww[None, None, :] >= wstart[:, :, None]) & (ww[None, None, :] < wend[:, :, None])
    mask = hmask[:, :, None, :, None] & wmask[:, None, :, None, :]      # [R, ph, pw, H, W]
    feat_r = feat[batch_idx]                                            # [R, C, H, W]
    masked = jnp.where(mask[:, None], feat_r[:, :, None, None, :, :], -jnp.inf)
    pooled = jnp.max(masked, axis=(-2, -1))                             # [R, C, ph, pw]
    empty = (hend <= hstart)[:, :, None] | (wend <= wstart)[:, None, :]
    return jnp.where(empty[:, None], 0.0, pooled)


# ---------------- fused encoder -> attention -> decoder kernel ---------------
def _head_kernel(encin_ref, bbox_ref,
                 w1e_ref, b1e_ref, w2e_ref, b2e_ref,
                 wown_ref, wctx_ref, batt_ref,
                 w1d_ref, b1d_ref, w2d_ref, b2d_ref,
                 o_ref, *, r_pad, c2):
    # encoder (BN already folded into linear 1) on own + all context rows at once
    x = encin_ref[...]                                     # [(1+c2)*r_pad, 128] f32
    xb = x.astype(jnp.bfloat16)
    h = jnp.dot(xb, w1e_ref[...], preferred_element_type=jnp.float32) + b1e_ref[...]
    h = jnp.maximum(h, 0.0)                                # Dropout: eval-mode no-op
    enc = jnp.dot(h.astype(jnp.bfloat16), w2e_ref[...],
                  preferred_element_type=jnp.float32) + b2e_ref[...]   # [(1+c2)*r_pad, 128]

    own_enc = enc[:r_pad]                                  # [r_pad, 128]
    w_own = wown_ref[...]                                  # [1, 128]
    w_ctx = wctx_ref[...]                                  # [1, 128]
    s_own = jnp.sum(own_enc * w_own, axis=-1, keepdims=True) + batt_ref[...]   # [r_pad, 1]

    # per-context encoded blocks are contiguous [r_pad, 128] slabs (context-major)
    ctx_blocks = []
    scores = []
    for j in range(c2):
        cj = enc[r_pad * (1 + j):r_pad * (2 + j)]          # [r_pad, 128]
        ctx_blocks.append(cj)
        scores.append(jnp.sum(cj * w_ctx, axis=-1, keepdims=True) + s_own)

    # softmax over contexts + weighted sum (no 3-D reshape needed)
    m = scores[0]
    for j in range(1, c2):
        m = jnp.maximum(m, scores[j])
    es = [jnp.exp(s - m) for s in scores]
    denom = es[0]
    for j in range(1, c2):
        denom = denom + es[j]
    inv = pl.reciprocal(denom, approx=True)
    ctx_rep = (es[0] * inv) * ctx_blocks[0]
    for j in range(1, c2):
        ctx_rep = ctx_rep + (es[j] * inv) * ctx_blocks[j]  # [r_pad, 128]

    # decoder on [own | context_representation | bbox], each padded to 128 lanes
    combined = jnp.concatenate(
        [xb[:r_pad], ctx_rep.astype(jnp.bfloat16), bbox_ref[...].astype(jnp.bfloat16)],
        axis=1)                                            # [r_pad, 384] bf16
    hd = jnp.dot(combined, w1d_ref[...], preferred_element_type=jnp.float32) + b1d_ref[...]
    hd = jnp.maximum(hd, 0.0)
    o_ref[...] = jnp.dot(hd.astype(jnp.bfloat16), w2d_ref[...],
                         preferred_element_type=jnp.float32) + b2d_ref[...]


def head(own, ctx_feat, bbox_feats, hp):
    """own: [R, nv], ctx_feat: [R, c2, nv], bbox_feats: [R, 4] -> [R, N_CLASSES]."""
    R, c2, nv = ctx_feat.shape
    r_pad = _round_up(R, 8)
    nvp = hp['w1t_e'].shape[0]                             # 128
    own_p = _pad2(own, r_pad, nvp)
    ctx_p = jnp.pad(ctx_feat, ((0, r_pad - R), (0, 0), (0, nvp - nv)))
    ctx_cm = ctx_p.transpose(1, 0, 2).reshape(c2 * r_pad, nvp)   # context-major rows
    enc_in = jnp.concatenate([own_p, ctx_cm], axis=0)      # [(1+c2)*r_pad, 128]
    bbox_p = _pad2(bbox_feats, r_pad, LANE)
    ncp = hp['w2t_d'].shape[1]                             # 128 (N_CLASSES padded)
    out = pl.pallas_call(
        functools.partial(_head_kernel, r_pad=r_pad, c2=c2),
        out_shape=jax.ShapeDtypeStruct((r_pad, ncp), jnp.float32),
        in_specs=[pl.BlockSpec(memory_space=_VMEM)] * 13,
        out_specs=pl.BlockSpec(memory_space=_VMEM),
        compiler_params=pltpu.CompilerParams(vmem_limit_bytes=_VMEM_LIMIT),
    )(enc_in, bbox_p,
      hp['w1t_e'], hp['b1_e'], hp['w2t_e'], hp['b2_e'],
      hp['w_own'], hp['w_ctx'], hp['b_att'],
      hp['w1t_d'], hp['b1_d'], hp['w2t_d'], hp['b2_d'])
    return out[:R, :N_CLASSES]


# ------------------------------ forward --------------------------------------
def forward(prep, images, bboxes, context_indices):
    # backbone (AlexNet-features[:7]-like), all matmuls in gridded Pallas kernels
    feat = images
    for (cin, cout, k, s, pad, relu, pool), cp in zip(CONV_CFG, prep['conv']):
        feat = conv2d(feat, cp['w_t'], cp['b'], k, s, pad, relu, cout)
        if pool:
            feat = max_pool2d(feat, 3, 2)
    spatial_scale = feat.shape[2] / IMG_H

    R = bboxes.shape[0]
    pooled = roi_pool(feat, bboxes, ROI_OUT, spatial_scale)     # [R, C, ph, pw]
    own = pooled.reshape(R, -1)                                 # [R, n_visual]
    nv = own.shape[1]

    # context gather (index -1 -> appended zero row)
    padded = jnp.concatenate([own, jnp.zeros((1, nv), jnp.float32)], axis=0)
    idx = jnp.where(context_indices < 0, R, context_indices)
    ctx_feat = padded[idx]                                      # [R, 2c, n_visual]

    # bbox features: [x, y, w, h]
    bb = bboxes[:, 1:]
    bbox_feats = jnp.concatenate([bb[:, :2], bb[:, 2:] - bb[:, :2]], axis=1)

    # fused encoder -> attention -> decoder (one Pallas kernel)
    return head(own, ctx_feat, bbox_feats, prep['head'])


# ------------------------------ deterministic init ---------------------------
def init_params(key):
    keys = jax.random.split(key, 10)

    conv_params = []
    for i, (cin, cout, k, *_rest) in enumerate(CONV_CFG):
        kw, kb = jax.random.split(keys[i])
        bound = (cin * k * k) ** -0.5
        conv_params.append({
            'w': jax.random.uniform(kw, (cout, cin, k, k), jnp.float32, -bound, bound),
            'b': jax.random.uniform(kb, (1, cout), jnp.float32, -bound, bound)})

    def linear(k, in_f, out_f):
        kw, kb = jax.random.split(k)
        bound = in_f ** -0.5
        return (jax.random.uniform(kw, (out_f, in_f), jnp.float32, -bound, bound),
                jax.random.uniform(kb, (1, out_f), jnp.float32, -bound, bound))

    def bn(k, n):
        k1, k2, k3, k4 = jax.random.split(k, 4)
        return {'gamma': 1.0 + 0.1 * jax.random.normal(k1, (1, n), jnp.float32),
                'beta': 0.1 * jax.random.normal(k2, (1, n), jnp.float32),
                'mean': 0.1 * jax.random.normal(k3, (1, n), jnp.float32),
                'var': 0.5 + jax.random.uniform(k4, (1, n), jnp.float32)}

    e_w1, e_b1 = linear(keys[3], N_VISUAL, HIDDEN)
    e_w2, e_b2 = linear(keys[4], HIDDEN, HIDDEN)
    encoder = {'w1': e_w1, 'b1': e_b1, 'w2': e_w2, 'b2': e_b2, **bn(keys[5], HIDDEN)}

    d_w1, d_b1 = linear(keys[6], N_TOTAL, N_TOTAL)
    d_w2, d_b2 = linear(keys[7], N_TOTAL, N_CLASSES)
    decoder = {'w1': d_w1, 'b1': d_b1, 'w2': d_w2, 'b2': d_b2, **bn(keys[8], N_TOTAL)}

    bound = (2 * HIDDEN) ** -0.5
    attention_p = {'w': jnp.zeros((1, 2 * HIDDEN), jnp.float32),   # "Attention layer weights initialized to 0"
                   'b': jax.random.uniform(keys[9], (1, 1), jnp.float32, -bound, bound)}

    return {'conv': conv_params, 'encoder': encoder,
            'decoder': decoder, 'attention': attention_p}


def _fold_bn(w, b, gamma, beta, mean, var):
    """Fold eval-mode BatchNorm1d into the preceding Linear. w: [out,in], b: [1,out]."""
    scale = gamma * lax.rsqrt(var + _BN_EPS)               # [1, out]
    return w * scale.T, (b - mean) * scale + beta


def prepare_params(p):
    """Fold BN, transpose, zero-pad to 128-lane shapes, cast weights to bf16."""
    conv = []
    for (cin, cout, k, *_rest), cp in zip(CONV_CFG, p['conv']):
        kk = cin * k * k
        kp = _round_up(kk, LANE)
        w_t = cp['w'].reshape(cout, kk).T                  # [kk, cout]
        conv.append({'w_t': _pad2(w_t, kp, LANE).astype(jnp.bfloat16),
                     'b': _pad2(cp['b'], 1, LANE)})

    e = p['encoder']
    w1f, b1f = _fold_bn(e['w1'], e['b1'], e['gamma'], e['beta'], e['mean'], e['var'])
    head_p = {
        'w1t_e': _pad2(w1f.T, LANE, LANE).astype(jnp.bfloat16),     # [64,32] -> [128,128]
        'b1_e': _pad2(b1f, 1, LANE),
        'w2t_e': _pad2(e['w2'].T, LANE, LANE).astype(jnp.bfloat16),
        'b2_e': _pad2(e['b2'], 1, LANE),
    }

    a = p['attention']
    head_p['w_own'] = _pad2(a['w'][:, :HIDDEN], 1, LANE)
    head_p['w_ctx'] = _pad2(a['w'][:, HIDDEN:], 1, LANE)
    head_p['b_att'] = a['b']

    d = p['decoder']
    w1f, b1f = _fold_bn(d['w1'], d['b1'], d['gamma'], d['beta'], d['mean'], d['var'])
    w1t = w1f.T                                            # [n_total, n_total] = [100,100]
    # decoder linear-1 rows scattered into the padded [own(128)|ctx(128)|bbox(128)] layout
    w1t_d = jnp.zeros((3 * LANE, LANE), jnp.float32)
    w1t_d = w1t_d.at[:N_VISUAL, :N_TOTAL].set(w1t[:N_VISUAL])
    w1t_d = w1t_d.at[LANE:LANE + HIDDEN, :N_TOTAL].set(w1t[N_VISUAL:N_VISUAL + HIDDEN])
    w1t_d = w1t_d.at[2 * LANE:2 * LANE + 4, :N_TOTAL].set(w1t[N_VISUAL + HIDDEN:])
    head_p['w1t_d'] = w1t_d.astype(jnp.bfloat16)
    head_p['b1_d'] = _pad2(b1f, 1, LANE)
    head_p['w2t_d'] = _pad2(d['w2'].T, LANE, LANE).astype(jnp.bfloat16)
    head_p['b2_d'] = _pad2(d['b2'], 1, LANE)

    return {'conv': conv, 'head': head_p}


# ------------------------------ main ------------------------------------------
if __name__ == "__main__":
    key = jax.random.PRNGKey(0)
    k_img, k_param = jax.random.split(key)

    images = jax.random.normal(k_img, (2, 3, IMG_H, IMG_H), jnp.float32)
    # 6 bboxes total across the 2 images: [img_idx, x1, y1, x2, y2] in pixel coords
    bboxes = jnp.array([
        [0., 2., 3., 40., 50.],
        [0., 10., 12., 30., 28.],
        [0., 20., 5., 60., 60.],
        [1., 0., 0., 63., 63.],
        [1., 5., 30., 55., 45.],
        [1., 16., 16., 48., 48.],
    ], jnp.float32)
    # [R, 2*context_size] bbox indices of contexts; -1 = missing -> zero feature row
    context_indices = jnp.array([
        [1, 2, -1, -1],
        [0, 2, -1, -1],
        [0, 1, -1, -1],
        [4, 5, -1, -1],
        [3, 5, -1, -1],
        [3, 4, -1, -1],
    ], jnp.int32)

    prep = prepare_params(init_params(k_param))
    out = jax.jit(forward)(prep, images, bboxes, context_indices)
    out = jax.block_until_ready(out)
    assert out.shape == (bboxes.shape[0], N_CLASSES)
    assert bool(jnp.all(jnp.isfinite(out)))
    print("KERNEL_OK")
</pallas_src>

<mosaic_0001>
module attributes {stable_mosaic.version = 11 : i64} {
  func.func @_conv_mm_kernel(%arg0: i32, %arg1: memref<256x384xbf16, #tpu.memory_space<vmem>>, %arg2: memref<384x128xbf16, #tpu.memory_space<vmem>>, %arg3: memref<1x128xf32, #tpu.memory_space<vmem>>, %arg4: memref<256x128xf32, #tpu.memory_space<vmem>>) attributes {dimension_semantics = [#tpu.dimension_semantics<parallel>], iteration_bounds = array<i64: 2>, scalar_prefetch = 0 : i64, scratch_operands = 0 : i64, tpu.core_type = #tpu.core_type<tc>, window_params = [{transform_indices = @transform_0, window_bounds = array<i64: 256, 384>}, {pipeline_mode = #tpu.pipeline_mode<synchronous>, transform_indices = @transform_1, window_bounds = array<i64: 384, 128>}, {pipeline_mode = #tpu.pipeline_mode<synchronous>, transform_indices = @transform_2, window_bounds = array<i64: 1, 128>}, {transform_indices = @transform_3, window_bounds = array<i64: 256, 128>}]} {
    %c0 = arith.constant 0 : index
    %c0_0 = arith.constant 0 : index
    %0 = vector.load %arg1[%c0, %c0_0] : memref<256x384xbf16, #tpu.memory_space<vmem>>, vector<256x384xbf16>
    %c0_1 = arith.constant 0 : index
    %c0_2 = arith.constant 0 : index
    %1 = vector.load %arg2[%c0_1, %c0_2] : memref<384x128xbf16, #tpu.memory_space<vmem>>, vector<384x128xbf16>
    %cst = arith.constant dense<0.000000e+00> : vector<256x128xf32>
    %2 = tpu.matmul %0, %1, %cst {dimension_numbers = #tpu.dot_dimension_numbers<[1], [0], [0], [1], [0, 0, 1, 1], [], []>} : vector<256x384xbf16>, vector<384x128xbf16>, vector<256x128xf32> -> vector<256x128xf32>
    %c0_3 = arith.constant 0 : index
    %c0_4 = arith.constant 0 : index
    %3 = vector.load %arg3[%c0_3, %c0_4] : memref<1x128xf32, #tpu.memory_space<vmem>>, vector<1x128xf32>
    %4 = vector.broadcast %3 : vector<1x128xf32> to vector<256x128xf32>
    %5 = arith.addf %2, %4 : vector<256x128xf32>
    %cst_5 = arith.constant 0.000000e+00 : f32
    %6 = vector.broadcast %cst_5 : f32 to vector<256x128xf32>
    %7 = arith.maximumf %5, %6 : vector<256x128xf32>
    %c0_6 = arith.constant 0 : index
    %c0_7 = arith.constant 0 : index
    %8 = vector.load %arg4[%c0_6, %c0_7] : memref<256x128xf32, #tpu.memory_space<vmem>>, vector<256x128xf32>
    tpu.vector_store %arg4[%c0_6, %c0_7], %7 {strides = array<i32>} : memref<256x128xf32, #tpu.memory_space<vmem>>, vector<256x128xf32>,
    return
  }
  func.func @transform_0(%arg0: i32) -> (i32, i32) {
    %c0_i32 = arith.constant 0 : i32
    %c0_i32_0 = arith.constant 0 : i32
    return %arg0, %c0_i32 : i32, i32
  }
  func.func @transform_1(%arg0: i32) -> (i32, i32) {
    %c0_i32 = arith.constant 0 : i32
    %c0_i32_0 = arith.constant 0 : i32
    %c0_i32_1 = arith.constant 0 : i32
    return %c0_i32, %c0_i32_0 : i32, i32
  }
  func.func @transform_2(%arg0: i32) -> (i32, i32) {
    %c0_i32 = arith.constant 0 : i32
    %c0_i32_0 = arith.constant 0 : i32
    %c0_i32_1 = arith.constant 0 : i32
    return %c0_i32, %c0_i32_0 : i32, i32
  }
  func.func @transform_3(%arg0: i32) -> (i32, i32) {
    %c0_i32 = arith.constant 0 : i32
    %c0_i32_0 = arith.constant 0 : i32
    return %arg0, %c0_i32 : i32, i32
  }
}

module attributes {stable_mosaic.version = 11 : i64} {
  func.func @_conv_mm_kernel(%arg0: i32, %arg1: memref<104x256xbf16, #tpu.memory_space<vmem>>, %arg2: memref<256x128xbf16, #tpu.memory_space<vmem>>, %arg3: memref<1x128xf32, #tpu.memory_space<vmem>>, %arg4: memref<104x128xf32, #tpu.memory_space<vmem>>) attributes {dimension_semantics = [#tpu.dimension_semantics<parallel>], iteration_bounds = array<i64: 1>, scalar_prefetch = 0 : i64, scratch_operands = 0 : i64, tpu.core_type = #tpu.core_type<tc>, window_params = [{transform_indices = @transform_0, window_bounds = array<i64: 104, 256>}, {pipeline_mode = #tpu.pipeline_mode<synchronous>, transform_indices = @transform_1, window_bounds = array<i64: 256, 128>}, {pipeline_mode = #tpu.pipeline_mode<synchronous>, transform_indices = @transform_2, window_bounds = array<i64: 1, 128>}, {transform_indices = @transform_3, window_bounds = array<i64: 104, 128>}]} {
    %c0 = arith.constant 0 : index
    %c0_0 = arith.constant 0 : index
    %0 = vector.load %arg1[%c0, %c0_0] : memref<104x256xbf16, #tpu.memory_space<vmem>>, vector<104x256xbf16>
    %c0_1 = arith.constant 0 : index
    %c0_2 = arith.constant 0 : index
    %1 = vector.load %arg2[%c0_1, %c0_2] : memref<256x128xbf16, #tpu.memory_space<vmem>>, vector<256x128xbf16>
    %cst = arith.constant dense<0.000000e+00> : vector<104x128xf32>
    %2 = tpu.matmul %0, %1, %cst {dimension_numbers = #tpu.dot_dimension_numbers<[1], [0], [0], [1], [0, 0, 1, 1], [], []>} : vector<104x256xbf16>, vector<256x128xbf16>, vector<104x128xf32> -> vector<104x128xf32>
    %c0_3 = arith.constant 0 : index
    %c0_4 = arith.constant 0 : index
    %3 = vector.load %arg3[%c0_3, %c0_4] : memref<1x128xf32, #tpu.memory_space<vmem>>, vector<1x128xf32>
    %4 = vector.broadcast %3 : vector<1x128xf32> to vector<104x128xf32>
    %5 = arith.addf %2, %4 : vector<104x128xf32>
    %cst_5 = arith.constant 0.000000e+00 : f32
    %6 = vector.broadcast %cst_5 : f32 to vector<104x128xf32>
    %7 = arith.maximumf %5, %6 : vector<104x128xf32>
    %c0_6 = arith.constant 0 : index
    %c0_7 = arith.constant 0 : index
    %8 = vector.load %arg4[%c0_6, %c0_7] : memref<104x128xf32, #tpu.memory_space<vmem>>, vector<104x128xf32>
    tpu.vector_store %arg4[%c0_6, %c0_7], %7 {strides = array<i32>} : memref<104x128xf32, #tpu.memory_space<vmem>>, vector<104x128xf32>,
    return
  }
  func.func @transform_0(%arg0: i32) -> (i32, i32) {
    %c0_i32 = arith.constant 0 : i32
    %c0_i32_0 = arith.constant 0 : i32
    return %arg0, %c0_i32 : i32, i32
  }
  func.func @transform_1(%arg0: i32) -> (i32, i32) {
    %c0_i32 = arith.constant 0 : i32
    %c0_i32_0 = arith.constant 0 : i32
    %c0_i32_1 = arith.constant 0 : i32
    return %c0_i32, %c0_i32_0 : i32, i32
  }
  func.func @transform_2(%arg0: i32) -> (i32, i32) {
    %c0_i32 = arith.constant 0 : i32
    %c0_i32_0 = arith.constant 0 : i32
    %c0_i32_1 = arith.constant 0 : i32
    return %c0_i32, %c0_i32_0 : i32, i32
  }
  func.func @transform_3(%arg0: i32) -> (i32, i32) {
    %c0_i32 = arith.constant 0 : i32
    %c0_i32_0 = arith.constant 0 : i32
    return %arg0, %c0_i32 : i32, i32
  }
}

module attributes {stable_mosaic.version = 11 : i64} {
  func.func @_conv_mm_kernel(%arg0: i32, %arg1: memref<24x256xbf16, #tpu.memory_space<vmem>>, %arg2: memref<256x128xbf16, #tpu.memory_space<vmem>>, %arg3: memref<1x128xf32, #tpu.memory_space<vmem>>, %arg4: memref<24x128xf32, #tpu.memory_space<vmem>>) attributes {dimension_semantics = [#tpu.dimension_semantics<parallel>], iteration_bounds = array<i64: 1>, scalar_prefetch = 0 : i64, scratch_operands = 0 : i64, tpu.core_type = #tpu.core_type<tc>, window_params = [{transform_indices = @transform_0, window_bounds = array<i64: 24, 256>}, {pipeline_mode = #tpu.pipeline_mode<synchronous>, transform_indices = @transform_1, window_bounds = array<i64: 256, 128>}, {pipeline_mode = #tpu.pipeline_mode<synchronous>, transform_indices = @transform_2, window_bounds = array<i64: 1, 128>}, {transform_indices = @transform_3, window_bounds = array<i64: 24, 128>}]} {
    %c0 = arith.constant 0 : index
    %c0_0 = arith.constant 0 : index
    %0 = vector.load %arg1[%c0, %c0_0] : memref<24x256xbf16, #tpu.memory_space<vmem>>, vector<24x256xbf16>
    %c0_1 = arith.constant 0 : index
    %c0_2 = arith.constant 0 : index
    %1 = vector.load %arg2[%c0_1, %c0_2] : memref<256x128xbf16, #tpu.memory_space<vmem>>, vector<256x128xbf16>
    %cst = arith.constant dense<0.000000e+00> : vector<24x128xf32>
    %2 = tpu.matmul %0, %1, %cst {dimension_numbers = #tpu.dot_dimension_numbers<[1], [0], [0], [1], [0, 0, 1, 1], [], []>} : vector<24x256xbf16>, vector<256x128xbf16>, vector<24x128xf32> -> vector<24x128xf32>
    %c0_3 = arith.constant 0 : index
    %c0_4 = arith.constant 0 : index
    %3 = vector.load %arg3[%c0_3, %c0_4] : memref<1x128xf32, #tpu.memory_space<vmem>>, vector<1x128xf32>
    %4 = vector.broadcast %3 : vector<1x128xf32> to vector<24x128xf32>
    %5 = arith.addf %2, %4 : vector<24x128xf32>
    %c0_5 = arith.constant 0 : index
    %c0_6 = arith.constant 0 : index
    %6 = vector.load %arg4[%c0_5, %c0_6] : memref<24x128xf32, #tpu.memory_space<vmem>>, vector<24x128xf32>
    tpu.vector_store %arg4[%c0_5, %c0_6], %5 {strides = array<i32>} : memref<24x128xf32, #tpu.memory_space<vmem>>, vector<24x128xf32>,
    return
  }
  func.func @transform_0(%arg0: i32) -> (i32, i32) {
    %c0_i32 = arith.constant 0 : i32
    %c0_i32_0 = arith.constant 0 : i32
    return %arg0, %c0_i32 : i32, i32
  }
  func.func @transform_1(%arg0: i32) -> (i32, i32) {
    %c0_i32 = arith.constant 0 : i32
    %c0_i32_0 = arith.constant 0 : i32
    %c0_i32_1 = arith.constant 0 : i32
    return %c0_i32, %c0_i32_0 : i32, i32
  }
  func.func @transform_2(%arg0: i32) -> (i32, i32) {
    %c0_i32 = arith.constant 0 : i32
    %c0_i32_0 = arith.constant 0 : i32
    %c0_i32_1 = arith.constant 0 : i32
    return %c0_i32, %c0_i32_0 : i32, i32
  }
  func.func @transform_3(%arg0: i32) -> (i32, i32) {
    %c0_i32 = arith.constant 0 : i32
    %c0_i32_0 = arith.constant 0 : i32
    return %arg0, %c0_i32 : i32, i32
  }
}

module attributes {stable_mosaic.version = 11 : i64} {
  func.func @_head_kernel(%arg0: memref<40x128xf32, #tpu.memory_space<vmem>>, %arg1: memref<8x128xf32, #tpu.memory_space<vmem>>, %arg2: memref<128x128xbf16, #tpu.memory_space<vmem>>, %arg3: memref<1x128xf32, #tpu.memory_space<vmem>>, %arg4: memref<128x128xbf16, #tpu.memory_space<vmem>>, %arg5: memref<1x128xf32, #tpu.memory_space<vmem>>, %arg6: memref<1x128xf32, #tpu.memory_space<vmem>>, %arg7: memref<1x128xf32, #tpu.memory_space<vmem>>, %arg8: memref<1x1xf32, #tpu.memory_space<vmem>>, %arg9: memref<384x128xbf16, #tpu.memory_space<vmem>>, %arg10: memref<1x128xf32, #tpu.memory_space<vmem>>, %arg11: memref<128x128xbf16, #tpu.memory_space<vmem>>, %arg12: memref<1x128xf32, #tpu.memory_space<vmem>>, %arg13: memref<8x128xf32, #tpu.memory_space<vmem>>) attributes {dimension_semantics = [], scalar_prefetch = 0 : i64, scratch_operands = 0 : i64, tpu.core_type = #tpu.core_type<tc>} {
    %c0 = arith.constant 0 : index
    %c0_0 = arith.constant 0 : index
    %0 = vector.load %arg0[%c0, %c0_0] : memref<40x128xf32, #tpu.memory_space<vmem>>, vector<40x128xf32>
    %1 = arith.truncf %0 : vector<40x128xf32> to vector<40x128xbf16>
    %c0_1 = arith.constant 0 : index
    %c0_2 = arith.constant 0 : index
    %2 = vector.load %arg2[%c0_1, %c0_2] : memref<128x128xbf16, #tpu.memory_space<vmem>>, vector<128x128xbf16>
    %cst = arith.constant dense<0.000000e+00> : vector<40x128xf32>
    %3 = tpu.matmul %1, %2, %cst {dimension_numbers = #tpu.dot_dimension_numbers<[1], [0], [0], [1], [0, 0, 1, 1], [], []>} : vector<40x128xbf16>, vector<128x128xbf16>, vector<40x128xf32> -> vector<40x128xf32>
    %c0_3 = arith.constant 0 : index
    %c0_4 = arith.constant 0 : index
    %4 = vector.load %arg3[%c0_3, %c0_4] : memref<1x128xf32, #tpu.memory_space<vmem>>, vector<1x128xf32>
    %5 = vector.broadcast %4 : vector<1x128xf32> to vector<40x128xf32>
    %6 = arith.addf %3, %5 : vector<40x128xf32>
    %cst_5 = arith.constant 0.000000e+00 : f32
    %7 = vector.broadcast %cst_5 : f32 to vector<40x128xf32>
    %8 = arith.maximumf %6, %7 : vector<40x128xf32>
    %9 = arith.truncf %8 : vector<40x128xf32> to vector<40x128xbf16>
    %c0_6 = arith.constant 0 : index
    %c0_7 = arith.constant 0 : index
    %10 = vector.load %arg4[%c0_6, %c0_7] : memref<128x128xbf16, #tpu.memory_space<vmem>>, vector<128x128xbf16>
    %cst_8 = arith.constant dense<0.000000e+00> : vector<40x128xf32>
    %11 = tpu.matmul %9, %10, %cst_8 {dimension_numbers = #tpu.dot_dimension_numbers<[1], [0], [0], [1], [0, 0, 1, 1], [], []>} : vector<40x128xbf16>, vector<128x128xbf16>, vector<40x128xf32> -> vector<40x128xf32>
    %c0_9 = arith.constant 0 : index
    %c0_10 = arith.constant 0 : index
    %12 = vector.load %arg5[%c0_9, %c0_10] : memref<1x128xf32, #tpu.memory_space<vmem>>, vector<1x128xf32>
    %13 = vector.broadcast %12 : vector<1x128xf32> to vector<40x128xf32>
    %14 = arith.addf %11, %13 : vector<40x128xf32>
    %15 = vector.extract_strided_slice %14 {offsets = [0, 0], sizes = [8, 128], strides = [1, 1]} : vector<40x128xf32> to vector<8x128xf32>
    %c0_11 = arith.constant 0 : index
    %c0_12 = arith.constant 0 : index
    %16 = vector.load %arg6[%c0_11, %c0_12] : memref<1x128xf32, #tpu.memory_space<vmem>>, vector<1x128xf32>
    %c0_13 = arith.constant 0 : index
    %c0_14 = arith.constant 0 : index
    %17 = vector.load %arg7[%c0_13, %c0_14] : memref<1x128xf32, #tpu.memory_space<vmem>>, vector<1x128xf32>
    %18 = vector.broadcast %16 : vector<1x128xf32> to vector<8x128xf32>
    %19 = arith.mulf %15, %18 : vector<8x128xf32>
    %cst_15 = arith.constant dense<0.000000e+00> : vector<8xf32>
    %20 = vector.multi_reduction <add>, %19, %cst_15 [1] : vector<8x128xf32> to vector<8xf32>
    %21 = vector.shape_cast %20 : vector<8xf32> to vector<8x1xf32>
    %c0_16 = arith.constant 0 : index
    %c0_17 = arith.constant 0 : index
    %22 = vector.load %arg8[%c0_16, %c0_17] : memref<1x1xf32, #tpu.memory_space<vmem>>, vector<1x1xf32>
    %23 = vector.broadcast %22 : vector<1x1xf32> to vector<8x1xf32>
    %24 = arith.addf %21, %23 : vector<8x1xf32>
    %25 = vector.extract_strided_slice %14 {offsets = [8, 0], sizes = [8, 128], strides = [1, 1]} : vector<40x128xf32> to vector<8x128xf32>
    %26 = vector.broadcast %17 : vector<1x128xf32> to vector<8x128xf32>
    %27 = arith.mulf %25, %26 : vector<8x128xf32>
    %cst_18 = arith.constant dense<0.000000e+00> : vector<8xf32>
    %28 = vector.multi_reduction <add>, %27, %cst_18 [1] : vector<8x128xf32> to vector<8xf32>
    %29 = vector.shape_cast %28 : vector<8xf32> to vector<8x1xf32>
    %30 = arith.addf %29, %24 : vector<8x1xf32>
    %31 = vector.extract_strided_slice %14 {offsets = [16, 0], sizes = [8, 128], strides = [1, 1]} : vector<40x128xf32> to vector<8x128xf32>
    %32 = vector.broadcast %17 : vector<1x128xf32> to vector<8x128xf32>
    %33 = arith.mulf %31, %32 : vector<8x128xf32>
    %cst_19 = arith.constant dense<0.000000e+00> : vector<8xf32>
    %34 = vector.multi_reduction <add>, %33, %cst_19 [1] : vector<8x128xf32> to vector<8xf32>
    %35 = vector.shape_cast %34 : vector<8xf32> to vector<8x1xf32>
    %36 = arith.addf %35, %24 : vector<8x1xf32>
    %37 = vector.extract_strided_slice %14 {offsets = [24, 0], sizes = [8, 128], strides = [1, 1]} : vector<40x128xf32> to vector<8x128xf32>
    %38 = vector.broadcast %17 : vector<1x128xf32> to vector<8x128xf32>
    %39 = arith.mulf %37, %38 : vector<8x128xf32>
    %cst_20 = arith.constant dense<0.000000e+00> : vector<8xf32>
    %40 = vector.multi_reduction <add>, %39, %cst_20 [1] : vector<8x128xf32> to vector<8xf32>
    %41 = vector.shape_cast %40 : vector<8xf32> to vector<8x1xf32>
    %42 = arith.addf %41, %24 : vector<8x1xf32>
    %43 = vector.extract_strided_slice %14 {offsets = [32, 0], sizes = [8, 128], strides = [1, 1]} : vector<40x128xf32> to vector<8x128xf32>
    %44 = vector.broadcast %17 : vector<1x128xf32> to vector<8x128xf32>
    %45 = arith.mulf %43, %44 : vector<8x128xf32>
    %cst_21 = arith.constant dense<0.000000e+00> : vector<8xf32>
    %46 = vector.multi_reduction <add>, %45, %cst_21 [1] : vector<8x128xf32> to vector<8xf32>
    %47 = vector.shape_cast %46 : vector<8xf32> to vector<8x1xf32>
    %48 = arith.addf %47, %24 : vector<8x1xf32>
    %49 = arith.maximumf %30, %36 : vector<8x1xf32>
    %50 = arith.maximumf %49, %42 : vector<8x1xf32>
    %51 = arith.maximumf %50, %48 : vector<8x1xf32>
    %52 = arith.subf %30, %51 : vector<8x1xf32>
    %53 = math.exp %52 : vector<8x1xf32>
    %54 = arith.subf %36, %51 : vector<8x1xf32>
    %55 = math.exp %54 : vector<8x1xf32>
    %56 = arith.subf %42, %51 : vector<8x1xf32>
    %57 = math.exp %56 : vector<8x1xf32>
    %58 = arith.subf %48, %51 : vector<8x1xf32>
    %59 = math.exp %58 : vector<8x1xf32>
    %60 = arith.addf %53, %55 : vector<8x1xf32>
    %61 = arith.addf %60, %57 : vector<8x1xf32>
    %62 = arith.addf %61, %59 : vector<8x1xf32>
    %63 = tpu.reciprocal %62 {approx = true} : vector<8x1xf32> -> vector<8x1xf32>
    %64 = arith.mulf %53, %63 : vector<8x1xf32>
    %65 = vector.broadcast %64 : vector<8x1xf32> to vector<8x128xf32>
    %66 = arith.mulf %65, %25 : vector<8x128xf32>
    %67 = arith.mulf %55, %63 : vector<8x1xf32>
    %68 = vector.broadcast %67 : vector<8x1xf32> to vector<8x128xf32>
    %69 = arith.mulf %68, %31 : vector<8x128xf32>
    %70 = arith.addf %66, %69 : vector<8x128xf32>
    %71 = arith.mulf %57, %63 : vector<8x1xf32>
    %72 = vector.broadcast %71 : vector<8x1xf32> to vector<8x128xf32>
    %73 = arith.mulf %72, %37 : vector<8x128xf32>
    %74 = arith.addf %70, %73 : vector<8x128xf32>
    %75 = arith.mulf %59, %63 : vector<8x1xf32>
    %76 = vector.broadcast %75 : vector<8x1xf32> to vector<8x128xf32>
    %77 = arith.mulf %76, %43 : vector<8x128xf32>
    %78 = arith.addf %74, %77 : vector<8x128xf32>
    %79 = vector.extract_strided_slice %1 {offsets = [0, 0], sizes = [8, 128], strides = [1, 1]} : vector<40x128xbf16> to vector<8x128xbf16>
    %80 = arith.truncf %78 : vector<8x128xf32> to vector<8x128xbf16>
    %c0_22 = arith.constant 0 : index
    %c0_23 = arith.constant 0 : index
    %81 = vector.load %arg1[%c0_22, %c0_23] : memref<8x128xf32, #tpu.memory_space<vmem>>, vector<8x128xf32>
    %82 = arith.truncf %81 : vector<8x128xf32> to vector<8x128xbf16>
    %83 = tpu.concatenate %79, %80, %82 in 1 : vector<8x128xbf16>, vector<8x128xbf16>, vector<8x128xbf16> -> vector<8x384xbf16>
    %c0_24 = arith.constant 0 : index
    %c0_25 = arith.constant 0 : index
    %84 = vector.load %arg9[%c0_24, %c0_25] : memref<384x128xbf16, #tpu.memory_space<vmem>>, vector<384x128xbf16>
    %cst_26 = arith.constant dense<0.000000e+00> : vector<8x128xf32>
    %85 = tpu.matmul %83, %84, %cst_26 {dimension_numbers = #tpu.dot_dimension_numbers<[1], [0], [0], [1], [0, 0, 1, 1], [], []>} : vector<8x384xbf16>, vector<384x128xbf16>, vector<8x128xf32> -> vector<8x128xf32>
    %c0_27 = arith.constant 0 : index
    %c0_28 = arith.constant 0 : index
    %86 = vector.load %arg10[%c0_27, %c0_28] : memref<1x128xf32, #tpu.memory_space<vmem>>, vector<1x128xf32>
    %87 = vector.broadcast %86 : vector<1x128xf32> to vector<8x128xf32>
    %88 = arith.addf %85, %87 : vector<8x128xf32>
    %cst_29 = arith.constant 0.000000e+00 : f32
    %89 = vector.broadcast %cst_29 : f32 to vector<8x128xf32>
    %90 = arith.maximumf %88, %89 : vector<8x128xf32>
    %91 = arith.truncf %90 : vector<8x128xf32> to vector<8x128xbf16>
    %c0_30 = arith.constant 0 : index
    %c0_31 = arith.constant 0 : index
    %92 = vector.load %arg11[%c0_30, %c0_31] : memref<128x128xbf16, #tpu.memory_space<vmem>>, vector<128x128xbf16>
    %cst_32 = arith.constant dense<0.000000e+00> : vector<8x128xf32>
    %93 = tpu.matmul %91, %92, %cst_32 {dimension_numbers = #tpu.dot_dimension_numbers<[1], [0], [0], [1], [0, 0, 1, 1], [], []>} : vector<8x128xbf16>, vector<128x128xbf16>, vector<8x128xf32> -> vector<8x128xf32>
    %c0_33 = arith.constant 0 : index
    %c0_34 = arith.constant 0 : index
    %94 = vector.load %arg12[%c0_33, %c0_34] : memref<1x128xf32, #tpu.memory_space<vmem>>, vector<1x128xf32>
    %95 = vector.broadcast %94 : vector<1x128xf32> to vector<8x128xf32>
    %96 = arith.addf %93, %95 : vector<8x128xf32>
    %c0_35 = arith.constant 0 : index
    %c0_36 = arith.constant 0 : index
    %97 = vector.load %arg13[%c0_35, %c0_36] : memref<8x128xf32, #tpu.memory_space<vmem>>, vector<8x128xf32>
    tpu.vector_store %arg13[%c0_35, %c0_36], %96 {strides = array<i32>} : memref<8x128xf32, #tpu.memory_space<vmem>>, vector<8x128xf32>,
    return
  }
}

</mosaic_0001>

<llo_original>
// kernel: forward.4
$region0: #{forward.4}
  #allocation0 [shape = 'u32[]', space=smem, size = 0x4, offset = 0x4, fixed_abs, tag = 'smem constant byte address 0x4 - core index']
  #allocation1 [shape = 'u32[144,128]{1,0:T(1,128)}', space=vmem, size = 0x12000, scoped, tag = 'internal scratch']
  %s0 = inlined_call_operand.vmem [shape: bf16[512,384], index: 0, kind: input, shape index: {}]
  %s1 = inlined_call_operand.vmem [shape: bf16[384,128], index: 1, kind: input, shape index: {}]
  %s2 = inlined_call_operand.vmem [shape: f32[1,128], index: 2, kind: input, shape index: {}]
  %s3 = inlined_call_operand.vmem [shape: f32[512,128], index: 3, kind: output, shape index: {}]
  %s4 = sld [smem:[#allocation0]]
  $region45: #{forward.4} parent=0
    _
  %s6 = ssub.s32 1, %s4
  %s7 = scalar_select 0, %s6, %s4
  loop: start=0, step=1, limit=4
  $region2: #{forward.4} parent=0 // loop_pre_header
    _
  $region3: #{forward.4} parent=0 // loop_header
    %s9 = sphi 0, %s13
    %p10 = scmp.ge.s32.totalorder %s9, 4
    %s19 = sphi 0, %s21
    %s22 = sphi 0, %s19
    %s23 = sphi 0, %s22
    %s39 = sphi 0, %s23
    %s43 = sphi 0, %s43
    %s45 = sphi 0, %s43
    %s46 = sphi 0, %s45
    %s60 = sphi 0, %s46
    %s64 = sphi 0, %s64
    %s66 = sphi 0, %s64
    %s67 = sphi 0, %s66
    %s81 = sphi 0, %s67
    %s87 = sphi 0, %s89
    %s90 = sphi 0, %s87
    %s91 = sphi 0, %s90
    %s107 = sphi 0, %s91
  $region4: #{forward.4} parent=0 // loop_header_branch
    %12 = sbr.rel (%p10) target = $region8
  $region5: #{forward.4} parent=0 // loop_body
    %s14 = ssub.s32 %s9, 1
    %s15 = ssub.s32 %s9, 2
    %s16 = sadd.s32 %s9, 1
    %s17 = ssub.s32 %s9, %s16
    %p18 = scmp.eq.s32.totalorder %s17, 0
    %s20 = sadd.s32 %s19, 1
    %s21 = scalar_select %p18, %s19, %s20
    %p24 = pneg %p18
    %p25 = scmp.eq.s32.totalorder %s9, 1
    %p26 = por %p24, %p25
    %p27 = scmp.ne.s32.totalorder %s19, %s22
    %p28 = scmp.eq.s32.totalorder %s9, 0
    %p29 = por %p27, %p28
    %p30 = scmp.ne.s32.totalorder %s19, %s22
    %p31 = scmp.eq.s32.totalorder %s14, 1
    %p32 = por %p30, %p31
    %p33 = scmp.ne.s32.totalorder %s22, %s23
    %p34 = scmp.eq.s32.totalorder %s14, 0
    %p35 = por %p33, %p34
    %p36 = scmp.ne.s32.totalorder %s22, %s23
    %p37 = scmp.eq.s32.totalorder %s15, 1
    %p38 = por %p36, %p37
    %p40 = scmp.ne.s32.totalorder %s23, %s39
    %p41 = scmp.eq.s32.totalorder %s15, 0
    %p42 = por %p40, %p41
    %s44 = sadd.s32 %s43, 1
    %p47 = scmp.eq.s32.totalorder %s9, 1
    %p48 = scmp.ne.s32.totalorder %s43, %s45
    %p49 = scmp.eq.s32.totalorder %s9, 0
    %p50 = por %p48, %p49
    %p51 = scmp.ne.s32.totalorder %s43, %s45
    %p52 = scmp.eq.s32.totalorder %s14, 1
    %p53 = por %p51, %p52
    %p54 = scmp.ne.s32.totalorder %s45, %s46
    %p55 = scmp.eq.s32.totalorder %s14, 0
    %p56 = por %p54, %p55
    %p57 = scmp.ne.s32.totalorder %s45, %s46
    %p58 = scmp.eq.s32.totalorder %s15, 1
    %p59 = por %p57, %p58
    %p61 = scmp.ne.s32.totalorder %s46, %s60
    %p62 = scmp.eq.s32.totalorder %s15, 0
    %p63 = por %p61, %p62
    %s65 = sadd.s32 %s64, 1
    %p68 = scmp.eq.s32.totalorder %s9, 1
    %p69 = scmp.ne.s32.totalorder %s64, %s66
    %p70 = scmp.eq.s32.totalorder %s9, 0
    %p71 = por %p69, %p70
    %p72 = scmp.ne.s32.totalorder %s64, %s66
    %p73 = scmp.eq.s32.totalorder %s14, 1
    %p74 = por %p72, %p73
    %p75 = scmp.ne.s32.totalorder %s66, %s67
    %p76 = scmp.eq.s32.totalorder %s14, 0
    %p77 = por %p75, %p76
    %p78 = scmp.ne.s32.totalorder %s66, %s67
    %p79 = scmp.eq.s32.totalorder %s15, 1
    %p80 = por %p78, %p79
    %p82 = scmp.ne.s32.totalorder %s67, %s81
    %p83 = scmp.eq.s32.totalorder %s15, 0
    %p84 = por %p82, %p83
    %s85 = ssub.s32 %s9, %s16
    %p86 = scmp.eq.s32.totalorder %s85, 0
    %s88 = sadd.s32 %s87, 1
    %s89 = scalar_select %p86, %s87, %s88
    %p92 = pneg %p86
    %p93 = scmp.eq.s32.totalorder %s9, 1
    %p94 = por %p92, %p93
    %p95 = scmp.ne.s32.totalorder %s87, %s90
    %p96 = scmp.eq.s32.totalorder %s9, 0
    %p97 = por %p95, %p96
    %p98 = scmp.ne.s32.totalorder %s87, %s90
    %p99 = scmp.eq.s32.totalorder %s14, 1
    %p100 = por %p98, %p99
    %p101 = scmp.ne.s32.totalorder %s90, %s91
    %p102 = scmp.eq.s32.totalorder %s14, 0
    %p103 = por %p101, %p102
    %p104 = scmp.ne.s32.totalorder %s90, %s91
    %p105 = scmp.eq.s32.totalorder %s15, 1
    %p106 = por %p104, %p105
    %p108 = scmp.ne.s32.totalorder %s91, %s107
    %p109 = scmp.eq.s32.totalorder %s15, 0
    %p110 = por %p108, %p109
    %p111 = scmp.le.s32.totalorder 1, %s9
    %p112 = scmp.lt.s32.totalorder %s9, 3
    %p113 = pnand %p111, %p112
    %p114 = pneg %p113
    // Predicated region
    $region9: #{forward.4} parent=5 // pred_check
      _
    $region10: #{forward.4} parent=5 // pred_check_branch
      %116 = sbr.rel (%p113) target = $region12
    $region11: #{forward.4} parent=5 // pred_region
      %s117 = ssub.s32 %s9, 1
      // Predicated region
      $region13: #{forward.4} parent=11 // pred_check
        %p118 = pneg %p56
      $region14: #{forward.4} parent=11 // pred_check_branch
        %120 = sbr.rel (%p118) target = $region16
      $region15: #{forward.4} parent=11 // pred_region
        _
      $region16: #{forward.4} parent=11 // pred_fallthru
        _
      // Predicated region
      $region17: #{forward.4} parent=11 // pred_check
        %p121 = pneg %p77
      $region18: #{forward.4} parent=11 // pred_check_branch
        %123 = sbr.rel (%p121) target = $region20
      $region19: #{forward.4} parent=11 // pred_region
        _
      $region20: #{forward.4} parent=11 // pred_fallthru
        _
    $region12: #{forward.4} parent=5 // pred_fallthru
      _
    %p124 = scmp.lt.s32.totalorder %s9, 2
    // Predicated region
    $region21: #{forward.4} parent=5 // pred_check
      %p125 = pneg %p124
    $region22: #{forward.4} parent=5 // pred_check_branch
      %127 = sbr.rel (%p125) target = $region24
    $region23: #{forward.4} parent=5 // pred_region
      // Predicated region
      $region25: #{forward.4} parent=23 // pred_check
        %p128 = pneg %p29
      $region26: #{forward.4} parent=23 // pred_check_branch
        %130 = sbr.rel (%p128) target = $region28
      $region27: #{forward.4} parent=23 // pred_region
        %s131 = smul.u32 32, %s9
        %p132 = scmp.lt.s32.totalorder %s131, 63
        %s133 = scalar_select %p132, %s131, 63
        %s134 = smul.addr %s133, 3
        %s135 = smul.addr %s134, 4
        %s136 = scalar_lea.vmem %s0, %s135
        %s137 = smul.u32 32, %s9
      $region28: #{forward.4} parent=23 // pred_fallthru
        _
    $region24: #{forward.4} parent=5 // pred_fallthru
      _
    %p138 = scmp.le.s32.totalorder 1, %s9
    %p139 = scmp.lt.s32.totalorder %s9, 3
    %p140 = pnand %p138, %p139
    %p141 = pneg %p140
    // Predicated region
    $region29: #{forward.4} parent=5 // pred_check
      _
    $region30: #{forward.4} parent=5 // pred_check_branch
      %143 = sbr.rel (%p140) target = $region32
    $region31: #{forward.4} parent=5 // pred_region
      %s144 = ssub.s32 %s9, 1
      %s145 = smul.u32 32, %s14
      %p146 = scmp.lt.s32.totalorder %s145, 63
      %s147 = scalar_select %p146, %s145, 63
      %s148 = smul.addr %s147, 3
      %s149 = smul.addr %s148, 4
      %s150 = scalar_lea.vmem %s0, %s149
      %p151 = pneg %p35
      %p152 = pneg %p32
      %p153 = pneg %p56
      %p154 = pneg %p53
      %p155 = pneg %p77
      %p156 = pneg %p74
      %p157 = pneg %p103
      %p158 = pneg %p100
      %s159 = smul.u32 32, %s14
      %p160 = scmp.lt.s32.totalorder %s159, 63
      %s161 = scalar_select %p160, %s159, 63
      %s162 = smul.addr %s161, 8
      %s163 = scalar_lea.vmem %s3, %s162
      %s164 = smul.u32 32, %s14
      %p165 = scmp.lt.s32.totalorder %s164, 63
      %s166 = scalar_select %p165, %s164, 63
      %s167 = smul.addr %s166, 3
      %s168 = smul.addr %s167, 4
      %s169 = scalar_lea.vmem %s0, %s168
      %s170 = smul.u32 32, %s14
      %s171 = smul.u32 32, %s14
      %p172 = scmp.lt.s32.totalorder %s171, 63
      %s173 = scalar_select %p172, %s171, 63
      %s174 = smul.addr %s173, 8
      %s175 = scalar_lea.vmem %s3, %s174
      %s176 = smul.u32 32, %s14
      %v178 = vld [vmem:[%s169] sm:$0xff]
      %v179 = vld [vmem:[%s169 + $0x8] sm:$0xf]
      %v180 = vld [vmem:[%s169 + $0xc] sm:$0xff]
      %v181 = vld [vmem:[%s169 + $0x14] sm:$0xf]
      %v182 = vld [vmem:[%s169 + $0x18] sm:$0xff]
      %v183 = vld [vmem:[%s169 + $0x20] sm:$0xf]
      %v184 = vld [vmem:[%s169 + $0x24] sm:$0xff]
      %v185 = vld [vmem:[%s169 + $0x2c] sm:$0xf]
      %v186 = vld [vmem:[%s169 + $0x30] sm:$0xff]
      %v187 = vld [vmem:[%s169 + $0x38] sm:$0xf]
      %v188 = vld [vmem:[%s169 + $0x3c] sm:$0xff]
      %v189 = vld [vmem:[%s169 + $0x44] sm:$0xf]
      %v190 = vld [vmem:[%s169 + $0x48] sm:$0xff]
      %v191 = vld [vmem:[%s169 + $0x50] sm:$0xf]
      %v192 = vld [vmem:[%s169 + $0x54] sm:$0xff]
      %v193 = vld [vmem:[%s169 + $0x5c] sm:$0xf]
      %v194 = vld [vmem:[%s169 + $0x60] sm:$0xff]
      %v195 = vld [vmem:[%s169 + $0x68] sm:$0xf]
      %v196 = vld [vmem:[%s169 + $0x6c] sm:$0xff]
      %v197 = vld [vmem:[%s169 + $0x74] sm:$0xf]
      %v198 = vld [vmem:[%s169 + $0x78] sm:$0xff]
      %v199 = vld [vmem:[%s169 + $0x80] sm:$0xf]
      %v200 = vld [vmem:[%s169 + $0x84] sm:$0xff]
      %v201 = vld [vmem:[%s169 + $0x8c] sm:$0xf]
      %v202 = vld [vmem:[%s169 + $0x90] sm:$0xff]
      %v203 = vld [vmem:[%s169 + $0x98] sm:$0xf]
      %v204 = vld [vmem:[%s169 + $0x9c] sm:$0xff]
      %v205 = vld [vmem:[%s169 + $0xa4] sm:$0xf]
      %v206 = vld [vmem:[%s169 + $0xa8] sm:$0xff]
      %v207 = vld [vmem:[%s169 + $0xb0] sm:$0xf]
      %v208 = vld [vmem:[%s169 + $0xb4] sm:$0xff]
      %v209 = vld [vmem:[%s169 + $0xbc] sm:$0xf]
      %v210 = vld [vmem:[%s169 + $0xc0] sm:$0xff]
      %v211 = vld [vmem:[%s169 + $0xc8] sm:$0xf]
      %v212 = vld [vmem:[%s169 + $0xcc] sm:$0xff]
      %v213 = vld [vmem:[%s169 + $0xd4] sm:$0xf]
      %v214 = vld [vmem:[%s169 + $0xd8] sm:$0xff]
      %v215 = vld [vmem:[%s169 + $0xe0] sm:$0xf]
      %v216 = vld [vmem:[%s169 + $0xe4] sm:$0xff]
      %v217 = vld [vmem:[%s169 + $0xec] sm:$0xf]
      %v218 = vld [vmem:[%s169 + $0xf0] sm:$0xff]
      %v219 = vld [vmem:[%s169 + $0xf8] sm:$0xf]
      %v220 = vld [vmem:[%s169 + $0xfc] sm:$0xff]
      %v221 = vld [vmem:[%s169 + $0x104] sm:$0xf]
      %v222 = vld [vmem:[%s169 + $0x108] sm:$0xff]
      %v223 = vld [vmem:[%s169 + $0x110] sm:$0xf]
      %v224 = vld [vmem:[%s169 + $0x114] sm:$0xff]
      %v225 = vld [vmem:[%s169 + $0x11c] sm:$0xf]
      %v226 = vld [vmem:[%s169 + $0x120] sm:$0xff]
      %v227 = vld [vmem:[%s169 + $0x128] sm:$0xf]
      %v228 = vld [vmem:[%s169 + $0x12c] sm:$0xff]
      %v229 = vld [vmem:[%s169 + $0x134] sm:$0xf]
      %v230 = vld [vmem:[%s169 + $0x138] sm:$0xff]
      %v231 = vld [vmem:[%s169 + $0x140] sm:$0xf]
      %v232 = vld [vmem:[%s169 + $0x144] sm:$0xff]
      %v233 = vld [vmem:[%s169 + $0x14c] sm:$0xf]
      %v234 = vld [vmem:[%s169 + $0x150] sm:$0xff]
      %v235 = vld [vmem:[%s169 + $0x158] sm:$0xf]
      %v236 = vld [vmem:[%s169 + $0x15c] sm:$0xff]
      %v237 = vld [vmem:[%s169 + $0x164] sm:$0xf]
      %v238 = vld [vmem:[%s169 + $0x168] sm:$0xff]
      %v239 = vld [vmem:[%s169 + $0x170] sm:$0xf]
      %v240 = vld [vmem:[%s169 + $0x174] sm:$0xff]
      %v241 = vld [vmem:[%s169 + $0x17c] sm:$0xf]
      %v242 = vld [vmem:[%s1] sm:$0xf]
      %v243 = vld [vmem:[%s1 + $0x4] sm:$0xf]
      %v244 = vld [vmem:[%s1 + $0x8] sm:$0xf]
      %v245 = vld [vmem:[%s1 + $0xc] sm:$0xf]
      %v246 = vld [vmem:[%s1 + $0x10] sm:$0xf]
      %v247 = vld [vmem:[%s1 + $0x14] sm:$0xf]
      %v248 = vld [vmem:[%s1 + $0x18] sm:$0xf]
      %v249 = vld [vmem:[%s1 + $0x1c] sm:$0xf]
      %v250 = vld [vmem:[%s1 + $0x20] sm:$0xf]
      %v251 = vld [vmem:[%s1 + $0x24] sm:$0xf]
      %v252 = vld [vmem:[%s1 + $0x28] sm:$0xf]
      %v253 = vld [vmem:[%s1 + $0x2c] sm:$0xf]
      %v254 = vld [vmem:[%s1 + $0x30] sm:$0xf]
      %v255 = vld [vmem:[%s1 + $0x34] sm:$0xf]
      %v256 = vld [vmem:[%s1 + $0x38] sm:$0xf]
      %v257 = vld [vmem:[%s1 + $0x3c] sm:$0xf]
      %v258 = vld [vmem:[%s1 + $0x40] sm:$0xf]
      %v259 = vld [vmem:[%s1 + $0x44] sm:$0xf]
      %v260 = vld [vmem:[%s1 + $0x48] sm:$0xf]
      %v261 = vld [vmem:[%s1 + $0x4c] sm:$0xf]
      %v262 = vld [vmem:[%s1 + $0x50] sm:$0xf]
      %v263 = vld [vmem:[%s1 + $0x54] sm:$0xf]
      %v264 = vld [vmem:[%s1 + $0x58] sm:$0xf]
      %v265 = vld [vmem:[%s1 + $0x5c] sm:$0xf]
      %v266 = vld [vmem:[%s1 + $0x60] sm:$0xf]
      %v267 = vld [vmem:[%s1 + $0x64] sm:$0xf]
      %v268 = vld [vmem:[%s1 + $0x68] sm:$0xf]
      %v269 = vld [vmem:[%s1 + $0x6c] sm:$0xf]
      %v270 = vld [vmem:[%s1 + $0x70] sm:$0xf]
      %v271 = vld [vmem:[%s1 + $0x74] sm:$0xf]
      %v272 = vld [vmem:[%s1 + $0x78] sm:$0xf]
      %v273 = vld [vmem:[%s1 + $0x7c] sm:$0xf]
      %v274 = vld [vmem:[%s1 + $0x80] sm:$0xf]
      %v275 = vld [vmem:[%s1 + $0x84] sm:$0xf]
      %v276 = vld [vmem:[%s1 + $0x88] sm:$0xf]
      %v277 = vld [vmem:[%s1 + $0x8c] sm:$0xf]
      %v278 = vld [vmem:[%s1 + $0x90] sm:$0xf]
      %v279 = vld [vmem:[%s1 + $0x94] sm:$0xf]
      %v280 = vld [vmem:[%s1 + $0x98] sm:$0xf]
      %v281 = vld [vmem:[%s1 + $0x9c] sm:$0xf]
      %v282 = vld [vmem:[%s1 + $0xa0] sm:$0xf]
      %v283 = vld [vmem:[%s1 + $0xa4] sm:$0xf]
      %v284 = vld [vmem:[%s1 + $0xa8] sm:$0xf]
      %v285 = vld [vmem:[%s1 + $0xac] sm:$0xf]
      %v286 = vld [vmem:[%s1 + $0xb0] sm:$0xf]
      %v287 = vld [vmem:[%s1 + $0xb4] sm:$0xf]
      %v288 = vld [vmem:[%s1 + $0xb8] sm:$0xf]
      %v289 = vld [vmem:[%s1 + $0xbc] sm:$0xf]
      %v290 = vld [vmem:[%s2] sm:$0x1]
      %v292 = vlaneseq
      %v293 = vshrl.u32 %v292, 7
      %v294 = vsub.s32 0, %v293
      %v295 = vrot.slane %v290, %v294
      %v361 = vunpack.c.l.b16 %v178
      %v362 = vunpack.c.h.b16 %v178
      %v363 = vunpack.c.l.b16 %v179
      %v364 = vunpack.c.l.b16 %v180
      %v365 = vunpack.c.h.b16 %v180
      %v366 = vunpack.c.l.b16 %v181
      %v367 = vunpack.c.l.b16 %v182
      %v368 = vunpack.c.h.b16 %v182
      %v369 = vunpack.c.l.b16 %v183
      %v370 = vunpack.c.l.b16 %v184
      %v371 = vunpack.c.h.b16 %v184
      %v372 = vunpack.c.l.b16 %v185
      %v373 = vunpack.c.l.b16 %v186
      %v374 = vunpack.c.h.b16 %v186
      %v375 = vunpack.c.l.b16 %v187
      %v376 = vunpack.c.l.b16 %v188
      %v377 = vunpack.c.h.b16 %v188
      %v378 = vunpack.c.l.b16 %v189
      %v379 = vunpack.c.l.b16 %v190
      %v380 = vunpack.c.h.b16 %v190
      %v381 = vunpack.c.l.b16 %v191
      %v382 = vunpack.c.l.b16 %v192
      %v383 = vunpack.c.h.b16 %v192
      %v384 = vunpack.c.l.b16 %v193
      %v385 = vunpack.c.l.b16 %v194
      %v386 = vunpack.c.h.b16 %v194
      %v387 = vunpack.c.l.b16 %v195
      %v388 = vunpack.c.l.b16 %v196
      %v389 = vunpack.c.h.b16 %v196
      %v390 = vunpack.c.l.b16 %v197
      %v391 = vunpack.c.l.b16 %v198
      %v392 = vunpack.c.h.b16 %v198
      %v393 = vunpack.c.l.b16 %v199
      %v394 = vunpack.c.l.b16 %v200
      %v395 = vunpack.c.h.b16 %v200
      %v396 = vunpack.c.l.b16 %v201
      %v397 = vunpack.c.l.b16 %v202
      %v398 = vunpack.c.h.b16 %v202
      %v399 = vunpack.c.l.b16 %v203
      %v400 = vunpack.c.l.b16 %v204
      %v401 = vunpack.c.h.b16 %v204
      %v402 = vunpack.c.l.b16 %v205
      %v403 = vunpack.c.l.b16 %v206
      %v404 = vunpack.c.h.b16 %v206
      %v405 = vunpack.c.l.b16 %v207
      %v406 = vunpack.c.l.b16 %v208
      %v407 = vunpack.c.h.b16 %v208
      %v408 = vunpack.c.l.b16 %v209
      %v409 = vunpack.c.l.b16 %v210
      %v410 = vunpack.c.h.b16 %v210
      %v411 = vunpack.c.l.b16 %v211
      %v412 = vunpack.c.l.b16 %v212
      %v413 = vunpack.c.h.b16 %v212
      %v414 = vunpack.c.l.b16 %v213
      %v415 = vunpack.c.l.b16 %v214
      %v416 = vunpack.c.h.b16 %v214
      %v417 = vunpack.c.l.b16 %v215
      %v418 = vunpack.c.l.b16 %v216
      %v419 = vunpack.c.h.b16 %v216
      %v420 = vunpack.c.l.b16 %v217
      %v421 = vunpack.c.l.b16 %v218
      %v422 = vunpack.c.h.b16 %v218
      %v423 = vunpack.c.l.b16 %v219
      %v424 = vunpack.c.l.b16 %v220
      %v425 = vunpack.c.h.b16 %v220
      %v426 = vunpack.c.l.b16 %v221
      %v427 = vunpack.c.l.b16 %v222
      %v428 = vunpack.c.h.b16 %v222
      %v429 = vunpack.c.l.b16 %v223
      %v430 = vunpack.c.l.b16 %v224
      %v431 = vunpack.c.h.b16 %v224
      %v432 = vunpack.c.l.b16 %v225
      %v433 = vunpack.c.l.b16 %v226
      %v434 = vunpack.c.h.b16 %v226
      %v435 = vunpack.c.l.b16 %v227
      %v436 = vunpack.c.l.b16 %v228
      %v437 = vunpack.c.h.b16 %v228
      %v438 = vunpack.c.l.b16 %v229
      %v439 = vunpack.c.l.b16 %v230
      %v440 = vunpack.c.h.b16 %v230
      %v441 = vunpack.c.l.b16 %v231
      %v442 = vunpack.c.l.b16 %v232
      %v443 = vunpack.c.h.b16 %v232
      %v444 = vunpack.c.l.b16 %v233
      %v445 = vunpack.c.l.b16 %v234
      %v446 = vunpack.c.h.b16 %v234
      %v447 = vunpack.c.l.b16 %v235
      %v448 = vunpack.c.l.b16 %v236
      %v449 = vunpack.c.h.b16 %v236
      %v450 = vunpack.c.l.b16 %v237
      %v451 = vunpack.c.l.b16 %v238
      %v452 = vunpack.c.h.b16 %v238
      %v453 = vunpack.c.l.b16 %v239
      %v454 = vunpack.c.l.b16 %v240
      %v455 = vunpack.c.h.b16 %v240
      %v456 = vunpack.c.l.b16 %v241
      %v457 = vpack.c.b16 %v364, %v361
      %v458 = vpack.c.b16 %v365, %v362
      %v459 = vpack.c.b16 %v366, %v363
      %v460 = vpack.c.b16 %v370, %v367
      %v461 = vpack.c.b16 %v371, %v368
      %v462 = vpack.c.b16 %v372, %v369
      %v463 = vpack.c.b16 %v376, %v373
      %v464 = vpack.c.b16 %v377, %v374
      %v465 = vpack.c.b16 %v378, %v375
      %v466 = vpack.c.b16 %v382, %v379
      %v467 = vpack.c.b16 %v383, %v380
      %v468 = vpack.c.b16 %v384, %v381
      %v469 = vpack.c.b16 %v388, %v385
      %v470 = vpack.c.b16 %v389, %v386
      %v471 = vpack.c.b16 %v390, %v387
      %v472 = vpack.c.b16 %v394, %v391
      %v473 = vpack.c.b16 %v395, %v392
      %v474 = vpack.c.b16 %v396, %v393
      %v475 = vpack.c.b16 %v400, %v397
      %v476 = vpack.c.b16 %v401, %v398
      %v477 = vpack.c.b16 %v402, %v399
      %v478 = vpack.c.b16 %v406, %v403
      %v479 = vpack.c.b16 %v407, %v404
      %v480 = vpack.c.b16 %v408, %v405
      %v481 = vpack.c.b16 %v412, %v409
      %v482 = vpack.c.b16 %v413, %v410
      %v483 = vpack.c.b16 %v414, %v411
      %v484 = vpack.c.b16 %v418, %v415
      %v485 = vpack.c.b16 %v419, %v416
      %v486 = vpack.c.b16 %v420, %v417
      %v487 = vpack.c.b16 %v424, %v421
      %v488 = vpack.c.b16 %v425, %v422
      %v489 = vpack.c.b16 %v426, %v423
      %v490 = vpack.c.b16 %v430, %v427
      %v491 = vpack.c.b16 %v431, %v428
      %v492 = vpack.c.b16 %v432, %v429
      %v493 = vpack.c.b16 %v436, %v433
      %v494 = vpack.c.b16 %v437, %v434
      %v495 = vpack.c.b16 %v438, %v435
      %v496 = vpack.c.b16 %v442, %v439
      %v497 = vpack.c.b16 %v443, %v440
      %v498 = vpack.c.b16 %v444, %v441
      %v499 = vpack.c.b16 %v448, %v445
      %v500 = vpack.c.b16 %v449, %v446
      %v501 = vpack.c.b16 %v450, %v447
      %v502 = vpack.c.b16 %v454, %v451
      %v503 = vpack.c.b16 %v455, %v452
      %v504 = vpack.c.b16 %v456, %v453
      %v601 = vunpack.c.l.b16 %v242
      %v602 = vunpack.c.l.b16 %v243
      %v603 = vunpack.c.l.b16 %v244
      %v604 = vunpack.c.l.b16 %v245
      %v605 = vunpack.c.l.b16 %v246
      %v606 = vunpack.c.l.b16 %v247
      %v607 = vunpack.c.l.b16 %v248
      %v608 = vunpack.c.l.b16 %v249
      %v609 = vunpack.c.l.b16 %v250
      %v610 = vunpack.c.l.b16 %v251
      %v611 = vunpack.c.l.b16 %v252
      %v612 = vunpack.c.l.b16 %v253
      %v613 = vunpack.c.l.b16 %v254
      %v614 = vunpack.c.l.b16 %v255
      %v615 = vunpack.c.l.b16 %v256
      %v616 = vunpack.c.l.b16 %v257
      %v617 = vunpack.c.l.b16 %v258
      %v618 = vunpack.c.l.b16 %v259
      %v619 = vunpack.c.l.b16 %v260
      %v620 = vunpack.c.l.b16 %v261
      %v621 = vunpack.c.l.b16 %v262
      %v622 = vunpack.c.l.b16 %v263
      %v623 = vunpack.c.l.b16 %v264
      %v624 = vunpack.c.l.b16 %v265
      %v625 = vunpack.c.l.b16 %v266
      %v626 = vunpack.c.l.b16 %v267
      %v627 = vunpack.c.l.b16 %v268
      %v628 = vunpack.c.l.b16 %v269
      %v629 = vunpack.c.l.b16 %v270
      %v630 = vunpack.c.l.b16 %v271
      %v631 = vunpack.c.l.b16 %v272
      %v632 = vunpack.c.l.b16 %v273
      %v633 = vunpack.c.l.b16 %v274
      %v634 = vunpack.c.l.b16 %v275
      %v635 = vunpack.c.l.b16 %v276
      %v636 = vunpack.c.l.b16 %v277
      %v637 = vunpack.c.l.b16 %v278
      %v638 = vunpack.c.l.b16 %v279
      %v639 = vunpack.c.l.b16 %v280
      %v640 = vunpack.c.l.b16 %v281
      %v641 = vunpack.c.l.b16 %v282
      %v642 = vunpack.c.l.b16 %v283
      %v643 = vunpack.c.l.b16 %v284
      %v644 = vunpack.c.l.b16 %v285
      %v645 = vunpack.c.l.b16 %v286
      %v646 = vunpack.c.l.b16 %v287
      %v647 = vunpack.c.l.b16 %v288
      %v648 = vunpack.c.l.b16 %v289
      %v649 = vpack.c.b16 %v602, %v601
      %v650 = vpack.c.b16 %v604, %v603
      %v651 = vpack.c.b16 %v606, %v605
      %v652 = vpack.c.b16 %v608, %v607
      %v653 = vpack.c.b16 %v610, %v609
      %v654 = vpack.c.b16 %v612, %v611
      %v655 = vpack.c.b16 %v614, %v613
      %v656 = vpack.c.b16 %v616, %v615
      %v657 = vpack.c.b16 %v618, %v617
      %v658 = vpack.c.b16 %v620, %v619
      %v659 = vpack.c.b16 %v622, %v621
      %v660 = vpack.c.b16 %v624, %v623
      %v661 = vpack.c.b16 %v626, %v625
      %v662 = vpack.c.b16 %v628, %v627
      %v663 = vpack.c.b16 %v630, %v629
      %v664 = vpack.c.b16 %v632, %v631
      %v665 = vpack.c.b16 %v634, %v633
      %v666 = vpack.c.b16 %v636, %v635
      %v667 = vpack.c.b16 %v638, %v637
      %v668 = vpack.c.b16 %v640, %v639
      %v669 = vpack.c.b16 %v642, %v641
      %v670 = vpack.c.b16 %v644, %v643
      %v671 = vpack.c.b16 %v646, %v645
      %v672 = vpack.c.b16 %v648, %v647
      %697 = vmatprep.subr.bf16.mxu0 0
      %698 = vmatpush1.bf16.msra.mxu0 %v649
      %699 = vmatprep.subr.bf16.mxu0 0
      %700 = vmatpush1.bf16.msra.mxu0 %v650
      %701 = vmatprep.subr.bf16.mxu0 0
      %702 = vmatpush1.bf16.msra.mxu0 %v651
      %703 = vmatprep.subr.bf16.mxu0 0
      %704 = vmatpush1.bf16.msra.mxu0 %v652
      %705 = vmatprep.subr.bf16.mxu0 0
      %706 = vmatpush1.bf16.msra.mxu0 %v653
      %707 = vmatprep.subr.bf16.mxu0 0
      %708 = vmatpush1.bf16.msra.mxu0 %v654
      %709 = vmatprep.subr.bf16.mxu0 0
      %710 = vmatpush1.bf16.msra.mxu0 %v655
      %711 = vmatprep.subr.bf16.mxu0 0
      %712 = vmatpush1.bf16.msra.mxu0 %v656
      %713 = vmatprep.subr.bf16.mxu0 0
      %714 = vmatpush1.bf16.msra.mxu0 %v657
      %715 = vmatprep.subr.bf16.mxu0 0
      %716 = vmatpush1.bf16.msra.mxu0 %v658
      %717 = vmatprep.subr.bf16.mxu0 0
      %718 = vmatpush1.bf16.msra.mxu0 %v659
      %719 = vmatprep.subr.bf16.mxu0 0
      %720 = vmatpush1.bf16.msra.mxu0 %v660
      %721 = vmatprep.subr.bf16.mxu0 0
      %722 = vmatpush1.bf16.msra.mxu0 %v661
      %723 = vmatprep.subr.bf16.mxu0 0
      %724 = vmatpush1.bf16.msra.mxu0 %v662
      %725 = vmatprep.subr.bf16.mxu0 0
      %726 = vmatpush1.bf16.msra.mxu0 %v663
      %727 = vmatprep.subr.bf16.mxu0 0
      %728 = vmatpush1.bf16.msra.mxu0 %v664
      %729 = vmatprep.mubr.bf16.mxu0 %v458
      %730 = vmatmul.mubr.bf16.gmra.mrb[0].mxu0 %v457
      %v731 = vpop.f32.mrb[0].mxu0
      %v732 = vadd.f32 %v295, %v731
      %v733 = vpop.f32.mrb[0].mxu0
      %v734 = vpop.f32.mrb[0].mxu0
      %v735 = vadd.f32 %v295, %v734
      %v736 = vpop.f32.mrb[0].mxu0
      %737 = vmatprep.mubr.bf16.mxu0 %v461
      %738 = vmatmul.mubr.bf16.gmra.mrb[0].mxu0 %v460
      %v739 = vpop.f32.mrb[0].mxu0
      %v740 = vadd.f32 %v295, %v739
      %v741 = vpop.f32.mrb[0].mxu0
      %v742 = vpop.f32.mrb[0].mxu0
      %v743 = vadd.f32 %v295, %v742
      %v744 = vpop.f32.mrb[0].mxu0
      %745 = vmatprep.mubr.bf16.mxu0 %v464
      %746 = vmatmul.mubr.bf16.gmra.mrb[0].mxu0 %v463
      %v747 = vpop.f32.mrb[0].mxu0
      %v748 = vadd.f32 %v295, %v747
      %v749 = vpop.f32.mrb[0].mxu0
      %v750 = vpop.f32.mrb[0].mxu0
      %v751 = vadd.f32 %v295, %v750
      %v752 = vpop.f32.mrb[0].mxu0
      %753 = vmatprep.mubr.bf16.mxu0 %v467
      %754 = vmatmul.mubr.bf16.gmra.mrb[0].mxu0 %v466
      %v755 = vpop.f32.mrb[0].mxu0
      %v756 = vadd.f32 %v295, %v755
      %v757 = vpop.f32.mrb[0].mxu0
      %v758 = vpop.f32.mrb[0].mxu0
      %v759 = vadd.f32 %v295, %v758
      %v760 = vpop.f32.mrb[0].mxu0
      %761 = vmatprep.mubr.bf16.mxu0 %v470
      %762 = vmatmul.mubr.bf16.gmra.mrb[0].mxu0 %v469
      %v763 = vpop.f32.mrb[0].mxu0
      %v764 = vadd.f32 %v295, %v763
      %v765 = vpop.f32.mrb[0].mxu0
      %v766 = vpop.f32.mrb[0].mxu0
      %v767 = vadd.f32 %v295, %v766
      %v768 = vpop.f32.mrb[0].mxu0
      %769 = vmatprep.mubr.bf16.mxu0 %v473
      %770 = vmatmul.mubr.bf16.gmra.mrb[0].mxu0 %v472
      %v771 = vpop.f32.mrb[0].mxu0
      %v772 = vadd.f32 %v295, %v771
      %v773 = vpop.f32.mrb[0].mxu0
      %v774 = vpop.f32.mrb[0].mxu0
      %v775 = vadd.f32 %v295, %v774
      %v776 = vpop.f32.mrb[0].mxu0
      %777 = vmatprep.mubr.bf16.mxu0 %v476
      %778 = vmatmul.mubr.bf16.gmra.mrb[0].mxu0 %v475
      %v779 = vpop.f32.mrb[0].mxu0
      %v780 = vadd.f32 %v295, %v779
      %v781 = vpop.f32.mrb[0].mxu0
      %v782 = vpop.f32.mrb[0].mxu0
      %v783 = vadd.f32 %v295, %v782
      %v784 = vpop.f32.mrb[0].mxu0
      %785 = vmatprep.mubr.bf16.mxu0 %v479
      %786 = vmatmul.mubr.bf16.gmra.mrb[0].mxu0 %v478
      %v787 = vpop.f32.mrb[0].mxu0
      %v788 = vadd.f32 %v295, %v787
      %v789 = vpop.f32.mrb[0].mxu0
      %v790 = vpop.f32.mrb[0].mxu0
      %v791 = vadd.f32 %v295, %v790
      %v792 = vpop.f32.mrb[0].mxu0
      %793 = vmatprep.mubr.bf16.mxu0 %v482
      %794 = vmatmul.mubr.bf16.gmra.mrb[0].mxu0 %v481
      %v795 = vpop.f32.mrb[0].mxu0
      %v796 = vadd.f32 %v295, %v795
      %v797 = vpop.f32.mrb[0].mxu0
      %v798 = vpop.f32.mrb[0].mxu0
      %v799 = vadd.f32 %v295, %v798
      %v800 = vpop.f32.mrb[0].mxu0
      %801 = vmatprep.mubr.bf16.mxu0 %v485
      %802 = vmatmul.mubr.bf16.gmra.mrb[0].mxu0 %v484
      %v803 = vpop.f32.mrb[0].mxu0
      %v804 = vadd.f32 %v295, %v803
      %v805 = vpop.f32.mrb[0].mxu0
      %v806 = vpop.f32.mrb[0].mxu0
      %v807 = vadd.f32 %v295, %v806
      %v808 = vpop.f32.mrb[0].mxu0
      %809 = vmatprep.mubr.bf16.mxu0 %v488
      %810 = vmatmul.mubr.bf16.gmra.mrb[0].mxu0 %v487
      %v811 = vpop.f32.mrb[0].mxu0
      %v812 = vadd.f32 %v295, %v811
      %v813 = vpop.f32.mrb[0].mxu0
      %v814 = vpop.f32.mrb[0].mxu0
      %v815 = vadd.f32 %v295, %v814
      %v816 = vpop.f32.mrb[0].mxu0
      %817 = vmatprep.mubr.bf16.mxu0 %v491
      %818 = vmatmul.mubr.bf16.gmra.mrb[0].mxu0 %v490
      %v819 = vpop.f32.mrb[0].mxu0
      %v820 = vadd.f32 %v295, %v819
      %v821 = vpop.f32.mrb[0].mxu0
      %v822 = vpop.f32.mrb[0].mxu0
      %v823 = vadd.f32 %v295, %v822
      %v824 = vpop.f32.mrb[0].mxu0
      %825 = vmatprep.mubr.bf16.mxu0 %v494
      %826 = vmatmul.mubr.bf16.gmra.mrb[0].mxu0 %v493
      %v827 = vpop.f32.mrb[0].mxu0
      %v828 = vadd.f32 %v295, %v827
      %v829 = vpop.f32.mrb[0].mxu0
      %v830 = vpop.f32.mrb[0].mxu0
      %v831 = vadd.f32 %v295, %v830
      %v832 = vpop.f32.mrb[0].mxu0
      %833 = vmatprep.mubr.bf16.mxu0 %v497
      %834 = vmatmul.mubr.bf16.gmra.mrb[0].mxu0 %v496
      %v835 = vpop.f32.mrb[0].mxu0
      %v836 = vadd.f32 %v295, %v835
      %v837 = vpop.f32.mrb[0].mxu0
      %v838 = vpop.f32.mrb[0].mxu0
      %v839 = vadd.f32 %v295, %v838
      %v840 = vpop.f32.mrb[0].mxu0
      %841 = vmatprep.mubr.bf16.mxu0 %v500
      %842 = vmatmul.mubr.bf16.gmra.mrb[0].mxu0 %v499
      %v843 = vpop.f32.mrb[0].mxu0
      %v844 = vadd.f32 %v295, %v843
      %v845 = vpop.f32.mrb[0].mxu0
      %v846 = vpop.f32.mrb[0].mxu0
      %v847 = vadd.f32 %v295, %v846
      %v848 = vpop.f32.mrb[0].mxu0
      %849 = vmatprep.mubr.bf16.mxu0 %v503
      %850 = vmatmul.mubr.bf16.gmra.mrb[0].mxu0 %v502
      %v851 = vpop.f32.mrb[0].mxu0
      %v852 = vadd.f32 %v295, %v851
      %v853 = vpop.f32.mrb[0].mxu0
      %v854 = vpop.f32.mrb[0].mxu0
      %v855 = vadd.f32 %v295, %v854
      %v856 = vpop.f32.mrb[0].mxu0
      %857 = vdwg.mxu0
      %858 = vmatprep.subr.bf16.mxu0 0
      %859 = vmatpush1.bf16.msra.mxu0 %v665
      %860 = vmatprep.subr.bf16.mxu0 0
      %861 = vmatpush1.bf16.msra.mxu0 %v666
      %862 = vmatprep.subr.bf16.mxu0 0
      %863 = vmatpush1.bf16.msra.mxu0 %v667
      %864 = vmatprep.subr.bf16.mxu0 0
      %865 = vmatpush1.bf16.msra.mxu0 %v668
      %866 = vmatprep.subr.bf16.mxu0 0
      %867 = vmatpush1.bf16.msra.mxu0 %v669
      %868 = vmatprep.subr.bf16.mxu0 0
      %869 = vmatpush1.bf16.msra.mxu0 %v670
      %870 = vmatprep.subr.bf16.mxu0 0
      %871 = vmatpush1.bf16.msra.mxu0 %v671
      %872 = vmatprep.subr.bf16.mxu0 0
      %873 = vmatpush1.bf16.msra.mxu0 %v672
      %874 = vmatprep.subr.bf16.mxu0 0
      %875 = vmatpush1.bf16.msra.mxu0 0
      %876 = vmatprep.subr.bf16.mxu0 0
      %877 = vmatpush1.bf16.msra.mxu0 0
      %878 = vmatprep.subr.bf16.mxu0 0
      %879 = vmatpush1.bf16.msra.mxu0 0
      %880 = vmatprep.subr.bf16.mxu0 0
      %881 = vmatpush1.bf16.msra.mxu0 0
      %882 = vmatprep.subr.bf16.mxu0 0
      %883 = vmatpush1.bf16.msra.mxu0 0
      %884 = vmatprep.subr.bf16.mxu0 0
      %885 = vmatpush1.bf16.msra.mxu0 0
      %886 = vmatprep.subr.bf16.mxu0 0
      %887 = vmatpush1.bf16.msra.mxu0 0
      %888 = vmatprep.subr.bf16.mxu0 0
      %889 = vmatpush1.bf16.msra.mxu0 0
      %890 = vmatprep.mubr.bf16.mxu0 0
      %891 = vmatmul.mubr.bf16.gmra.mrb[0].mxu0 %v459
      %v892 = vpop.f32.mrb[0].mxu0
      %v893 = vadd.f32 %v732, %v892
      %v894 = vpop.f32.mrb[0].mxu0
      %v895 = vpop.f32.mrb[0].mxu0
      %v896 = vadd.f32 %v735, %v895
      %v897 = vpop.f32.mrb[0].mxu0
      %898 = vmatprep.mubr.bf16.mxu0 0
      %899 = vmatmul.mubr.bf16.gmra.mrb[0].mxu0 %v462
      %v900 = vpop.f32.mrb[0].mxu0
      %v901 = vadd.f32 %v740, %v900
      %v902 = vpop.f32.mrb[0].mxu0
      %v903 = vpop.f32.mrb[0].mxu0
      %v904 = vadd.f32 %v743, %v903
      %v905 = vpop.f32.mrb[0].mxu0
      %906 = vmatprep.mubr.bf16.mxu0 0
      %907 = vmatmul.mubr.bf16.gmra.mrb[0].mxu0 %v465
      %v908 = vpop.f32.mrb[0].mxu0
      %v909 = vadd.f32 %v748, %v908
      %v910 = vpop.f32.mrb[0].mxu0
      %v911 = vpop.f32.mrb[0].mxu0
      %v912 = vadd.f32 %v751, %v911
      %v913 = vpop.f32.mrb[0].mxu0
      %914 = vmatprep.mubr.bf16.mxu0 0
      %915 = vmatmul.mubr.bf16.gmra.mrb[0].mxu0 %v468
      %v916 = vpop.f32.mrb[0].mxu0
      %v917 = vadd.f32 %v756, %v916
      %v918 = vpop.f32.mrb[0].mxu0
      %v919 = vpop.f32.mrb[0].mxu0
      %v920 = vadd.f32 %v759, %v919
      %v921 = vpop.f32.mrb[0].mxu0
      %922 = vmatprep.mubr.bf16.mxu0 0
      %923 = vmatmul.mubr.bf16.gmra.mrb[0].mxu0 %v471
      %v924 = vpop.f32.mrb[0].mxu0
      %v925 = vadd.f32 %v764, %v924
      %v926 = vpop.f32.mrb[0].mxu0
      %v927 = vpop.f32.mrb[0].mxu0
      %v928 = vadd.f32 %v767, %v927
      %v929 = vpop.f32.mrb[0].mxu0
      %930 = vmatprep.mubr.bf16.mxu0 0
      %931 = vmatmul.mubr.bf16.gmra.mrb[0].mxu0 %v474
      %v932 = vpop.f32.mrb[0].mxu0
      %v933 = vadd.f32 %v772, %v932
      %v934 = vpop.f32.mrb[0].mxu0
      %v935 = vpop.f32.mrb[0].mxu0
      %v936 = vadd.f32 %v775, %v935
      %v937 = vpop.f32.mrb[0].mxu0
      %938 = vmatprep.mubr.bf16.mxu0 0
      %939 = vmatmul.mubr.bf16.gmra.mrb[0].mxu0 %v477
      %v940 = vpop.f32.mrb[0].mxu0
      %v941 = vadd.f32 %v780, %v940
      %v942 = vpop.f32.mrb[0].mxu0
      %v943 = vpop.f32.mrb[0].mxu0
      %v944 = vadd.f32 %v783, %v943
      %v945 = vpop.f32.mrb[0].mxu0
      %946 = vmatprep.mubr.bf16.mxu0 0
      %947 = vmatmul.mubr.bf16.gmra.mrb[0].mxu0 %v480
      %v948 = vpop.f32.mrb[0].mxu0
      %v949 = vadd.f32 %v788, %v948
      %v950 = vpop.f32.mrb[0].mxu0
      %v951 = vpop.f32.mrb[0].mxu0
      %v952 = vadd.f32 %v791, %v951
      %v953 = vpop.f32.mrb[0].mxu0
      %954 = vmatprep.mubr.bf16.mxu0 0
      %955 = vmatmul.mubr.bf16.gmra.mrb[0].mxu0 %v483
      %v956 = vpop.f32.mrb[0].mxu0
      %v957 = vadd.f32 %v796, %v956
      %v958 = vpop.f32.mrb[0].mxu0
      %v959 = vpop.f32.mrb[0].mxu0
      %v960 = vadd.f32 %v799, %v959
      %v961 = vpop.f32.mrb[0].mxu0
      %962 = vmatprep.mubr.bf16.mxu0 0
      %963 = vmatmul.mubr.bf16.gmra.mrb[0].mxu0 %v486
      %v964 = vpop.f32.mrb[0].mxu0
      %v965 = vadd.f32 %v804, %v964
      %v966 = vpop.f32.mrb[0].mxu0
      %v967 = vpop.f32.mrb[0].mxu0
      %v968 = vadd.f32 %v807, %v967
      %v969 = vpop.f32.mrb[0].mxu0
      %970 = vmatprep.mubr.bf16.mxu0 0
      %971 = vmatmul.mubr.bf16.gmra.mrb[0].mxu0 %v489
      %v972 = vpop.f32.mrb[0].mxu0
      %v973 = vadd.f32 %v812, %v972
      %v974 = vpop.f32.mrb[0].mxu0
      %v975 = vpop.f32.mrb[0].mxu0
      %v976 = vadd.f32 %v815, %v975
      %v977 = vpop.f32.mrb[0].mxu0
      %978 = vmatprep.mubr.bf16.mxu0 0
      %979 = vmatmul.mubr.bf16.gmra.mrb[0].mxu0 %v492
      %v980 = vpop.f32.mrb[0].mxu0
      %v981 = vadd.f32 %v820, %v980
      %v982 = vpop.f32.mrb[0].mxu0
      %v983 = vpop.f32.mrb[0].mxu0
      %v984 = vadd.f32 %v823, %v983
      %v985 = vpop.f32.mrb[0].mxu0
      %986 = vmatprep.mubr.bf16.mxu0 0
      %987 = vmatmul.mubr.bf16.gmra.mrb[0].mxu0 %v495
      %v988 = vpop.f32.mrb[0].mxu0
      %v989 = vadd.f32 %v828, %v988
      %v990 = vpop.f32.mrb[0].mxu0
      %v991 = vpop.f32.mrb[0].mxu0
      %v992 = vadd.f32 %v831, %v991
      %v993 = vpop.f32.mrb[0].mxu0
      %994 = vmatprep.mubr.bf16.mxu0 0
      %995 = vmatmul.mubr.bf16.gmra.mrb[0].mxu0 %v498
      %v996 = vpop.f32.mrb[0].mxu0
      %v997 = vadd.f32 %v836, %v996
      %v998 = vpop.f32.mrb[0].mxu0
      %v999 = vpop.f32.mrb[0].mxu0
      %v1000 = vadd.f32 %v839, %v999
      %v1001 = vpop.f32.mrb[0].mxu0
      %1002 = vmatprep.mubr.bf16.mxu0 0
      %1003 = vmatmul.mubr.bf16.gmra.mrb[0].mxu0 %v501
      %v1004 = vpop.f32.mrb[0].mxu0
      %v1005 = vadd.f32 %v844, %v1004
      %v1006 = vpop.f32.mrb[0].mxu0
      %v1007 = vpop.f32.mrb[0].mxu0
      %v1008 = vadd.f32 %v847, %v1007
      %v1009 = vpop.f32.mrb[0].mxu0
      %1010 = vmatprep.mubr.bf16.mxu0 0
      %1011 = vmatmul.mubr.bf16.gmra.mrb[0].mxu0 %v504
      %v1012 = vpop.f32.mrb[0].mxu0
      %v1013 = vadd.f32 %v852, %v1012
      %v1014 = vpop.f32.mrb[0].mxu0
      %v1015 = vpop.f32.mrb[0].mxu0
      %v1016 = vadd.f32 %v855, %v1015
      %v1017 = vpop.f32.mrb[0].mxu0
      %1018 = vdwg.mxu0
      %v1019 = vmax.f32 %v893, 0.0
      %v1020 = vmax.f32 %v896, 0.0
      %v1021 = vmax.f32 %v901, 0.0
      %v1022 = vmax.f32 %v904, 0.0
      %v1023 = vmax.f32 %v909, 0.0
      %v1024 = vmax.f32 %v912, 0.0
      %v1025 = vmax.f32 %v917, 0.0
      %v1026 = vmax.f32 %v920, 0.0
      %v1027 = vmax.f32 %v925, 0.0
      %v1028 = vmax.f32 %v928, 0.0
      %v1029 = vmax.f32 %v933, 0.0
      %v1030 = vmax.f32 %v936, 0.0
      %v1031 = vmax.f32 %v941, 0.0
      %v1032 = vmax.f32 %v944, 0.0
      %v1033 = vmax.f32 %v949, 0.0
      %v1034 = vmax.f32 %v952, 0.0
      %v1035 = vmax.f32 %v957, 0.0
      %v1036 = vmax.f32 %v960, 0.0
      %v1037 = vmax.f32 %v965, 0.0
      %v1038 = vmax.f32 %v968, 0.0
      %v1039 = vmax.f32 %v973, 0.0
      %v1040 = vmax.f32 %v976, 0.0
      %v1041 = vmax.f32 %v981, 0.0
      %v1042 = vmax.f32 %v984, 0.0
      %v1043 = vmax.f32 %v989, 0.0
      %v1044 = vmax.f32 %v992, 0.0
      %v1045 = vmax.f32 %v997, 0.0
      %v1046 = vmax.f32 %v1000, 0.0
      %v1047 = vmax.f32 %v1005, 0.0
      %v1048 = vmax.f32 %v1008, 0.0
      %v1049 = vmax.f32 %v1013, 0.0
      %v1050 = vmax.f32 %v1016, 0.0
      %1051 = vst [vmem:[%s175] sm:$0xff] %v1019
      %1052 = vst [vmem:[%s175 + $0x8] sm:$0xff] %v1020
      %1053 = vst [vmem:[%s175 + $0x10] sm:$0xff] %v1021
      %1054 = vst [vmem:[%s175 + $0x18] sm:$0xff] %v1022
      %1055 = vst [vmem:[%s175 + $0x20] sm:$0xff] %v1023
      %1056 = vst [vmem:[%s175 + $0x28] sm:$0xff] %v1024
      %1057 = vst [vmem:[%s175 + $0x30] sm:$0xff] %v1025
      %1058 = vst [vmem:[%s175 + $0x38] sm:$0xff] %v1026
      %1059 = vst [vmem:[%s175 + $0x40] sm:$0xff] %v1027
      %1060 = vst [vmem:[%s175 + $0x48] sm:$0xff] %v1028
      %1061 = vst [vmem:[%s175 + $0x50] sm:$0xff] %v1029
      %1062 = vst [vmem:[%s175 + $0x58] sm:$0xff] %v1030
      %1063 = vst [vmem:[%s175 + $0x60] sm:$0xff] %v1031
      %1064 = vst [vmem:[%s175 + $0x68] sm:$0xff] %v1032
      %1065 = vst [vmem:[%s175 + $0x70] sm:$0xff] %v1033
      %1066 = vst [vmem:[%s175 + $0x78] sm:$0xff] %v1034
      %1067 = vst [vmem:[%s175 + $0x80] sm:$0xff] %v1035
      %1068 = vst [vmem:[%s175 + $0x88] sm:$0xff] %v1036
      %1069 = vst [vmem:[%s175 + $0x90] sm:$0xff] %v1037
      %1070 = vst [vmem:[%s175 + $0x98] sm:$0xff] %v1038
      %1071 = vst [vmem:[%s175 + $0xa0] sm:$0xff] %v1039
      %1072 = vst [vmem:[%s175 + $0xa8] sm:$0xff] %v1040
      %1073 = vst [vmem:[%s175 + $0xb0] sm:$0xff] %v1041
      %1074 = vst [vmem:[%s175 + $0xb8] sm:$0xff] %v1042
      %1075 = vst [vmem:[%s175 + $0xc0] sm:$0xff] %v1043
      %1076 = vst [vmem:[%s175 + $0xc8] sm:$0xff] %v1044
      %1077 = vst [vmem:[%s175 + $0xd0] sm:$0xff] %v1045
      %1078 = vst [vmem:[%s175 + $0xd8] sm:$0xff] %v1046
      %1079 = vst [vmem:[%s175 + $0xe0] sm:$0xff] %v1047
      %1080 = vst [vmem:[%s175 + $0xe8] sm:$0xff] %v1048
      %1081 = vst [vmem:[%s175 + $0xf0] sm:$0xff] %v1049
      %1082 = vst [vmem:[%s175 + $0xf8] sm:$0xff] %v1050
      %s1083 = smul.u32 32, %s14
      %p1084 = scmp.lt.s32.totalorder %s1083, 63
      %s1085 = scalar_select %p1084, %s1083, 63
      %s1086 = smul.addr %s1085, 8
      %s1087 = scalar_lea.vmem %s3, %s1086
      // Predicated region
      $region33: #{forward.4} parent=31 // pred_check
        %p1088 = pneg %p100
      $region34: #{forward.4} parent=31 // pred_check_branch
        %1090 = sbr.rel (%p1088) target = $region36
      $region35: #{forward.4} parent=31 // pred_region
        %s1091 = smul.u32 32, %s14
      $region36: #{forward.4} parent=31 // pred_fallthru
        _
    $region32: #{forward.4} parent=5 // pred_fallthru
      _
    %p1092 = scmp.le.s32.totalorder 2, %s9
    // Predicated region
    $region37: #{forward.4} parent=5 // pred_check
      %p1093 = pneg %p1092
    $region38: #{forward.4} parent=5 // pred_check_branch
      %1095 = sbr.rel (%p1093) target = $region40
    $region39: #{forward.4} parent=5 // pred_region
      %s1096 = ssub.s32 %s9, 2
      // Predicated region
      $region41: #{forward.4} parent=39 // pred_check
        %p1097 = pneg %p106
      $region42: #{forward.4} parent=39 // pred_check_branch
        %1099 = sbr.rel (%p1097) target = $region44
      $region43: #{forward.4} parent=39 // pred_region
        %s1100 = smul.u32 32, %s15
        %p1101 = scmp.lt.s32.totalorder %s1100, 63
        %s1102 = scalar_select %p1101, %s1100, 63
        %s1103 = smul.addr %s1102, 8
        %s1104 = scalar_lea.vmem %s3, %s1103
      $region44: #{forward.4} parent=39 // pred_fallthru
        _
    $region40: #{forward.4} parent=5 // pred_fallthru
      _
  $region6: #{forward.4} parent=0 // loop_footer
    %s13 = sadd.s32 1, %s9
  $region7: #{forward.4} parent=0 // loop_footer_branch
    %8 = sbr.rel target = $region3
  $region8: #{forward.4} parent=0 // loop_exit
    _

// kernel: forward.5
$region0: #{forward.5}
  #allocation0 [shape = 'u32[]', space=smem, size = 0x4, offset = 0x4, fixed_abs, tag = 'smem constant byte address 0x4 - core index']
  #allocation1 [shape = 'u32[144,128]{1,0:T(1,128)}', space=vmem, size = 0x12000, scoped, tag = 'internal scratch']
  %s0 = inlined_call_operand.vmem [shape: bf16[104,256], index: 0, kind: input, shape index: {}]
  %s1 = inlined_call_operand.vmem [shape: bf16[256,128], index: 1, kind: input, shape index: {}]
  %s2 = inlined_call_operand.vmem [shape: f32[1,128], index: 2, kind: input, shape index: {}]
  %s3 = inlined_call_operand.vmem [shape: f32[104,128], index: 3, kind: output, shape index: {}]
  %s4 = sld [smem:[#allocation0]]
  $region22: #{forward.5} parent=0
    _
  %s6 = ssub.s32 1, %s4
  %s7 = scalar_select 0, %s6, %s4
  // Predicated region
  $region2: #{forward.5} parent=0 // pred_check
    _
  $region3: #{forward.5} parent=0 // pred_check_branch
    %9 = sbr.rel (0) target = $region5
  $region4: #{forward.5} parent=0 // pred_region
    _
  $region5: #{forward.5} parent=0 // pred_fallthru
    _
  // Predicated region
  $region6: #{forward.5} parent=0 // pred_check
    _
  $region7: #{forward.5} parent=0 // pred_check_branch
    %11 = sbr.rel (0) target = $region9
  $region8: #{forward.5} parent=0 // pred_region
    _
  $region9: #{forward.5} parent=0 // pred_fallthru
    _
  // Predicated region
  $region10: #{forward.5} parent=0 // pred_check
    _
  $region11: #{forward.5} parent=0 // pred_check_branch
    %13 = sbr.rel (0) target = $region13
  $region12: #{forward.5} parent=0 // pred_region
    _
  $region13: #{forward.5} parent=0 // pred_fallthru
    _
  %v15 = vld [vmem:[%s0] sm:$0xff]
  %v16 = vld [vmem:[%s0 + $0x8] sm:$0xff]
  %v17 = vld [vmem:[%s0 + $0x10] sm:$0xff]
  %v18 = vld [vmem:[%s0 + $0x18] sm:$0xff]
  %v19 = vld [vmem:[%s0 + $0x20] sm:$0xff]
  %v20 = vld [vmem:[%s0 + $0x28] sm:$0xff]
  %v21 = vld [vmem:[%s0 + $0x30] sm:$0xff]
  %v22 = vld [vmem:[%s0 + $0x38] sm:$0xff]
  %v23 = vld [vmem:[%s0 + $0x40] sm:$0xff]
  %v24 = vld [vmem:[%s0 + $0x48] sm:$0xff]
  %v25 = vld [vmem:[%s0 + $0x50] sm:$0xff]
  %v26 = vld [vmem:[%s0 + $0x58] sm:$0xff]
  %v27 = vld [vmem:[%s0 + $0x60] sm:$0xff]
  %v28 = vld [vmem:[%s1] sm:$0xf]
  %v29 = vld [vmem:[%s1 + $0x4] sm:$0xf]
  %v30 = vld [vmem:[%s1 + $0x8] sm:$0xf]
  %v31 = vld [vmem:[%s1 + $0xc] sm:$0xf]
  %v32 = vld [vmem:[%s1 + $0x10] sm:$0xf]
  %v33 = vld [vmem:[%s1 + $0x14] sm:$0xf]
  %v34 = vld [vmem:[%s1 + $0x18] sm:$0xf]
  %v35 = vld [vmem:[%s1 + $0x1c] sm:$0xf]
  %v36 = vld [vmem:[%s1 + $0x20] sm:$0xf]
  %v37 = vld [vmem:[%s1 + $0x24] sm:$0xf]
  %v38 = vld [vmem:[%s1 + $0x28] sm:$0xf]
  %v39 = vld [vmem:[%s1 + $0x2c] sm:$0xf]
  %v40 = vld [vmem:[%s1 + $0x30] sm:$0xf]
  %v41 = vld [vmem:[%s1 + $0x34] sm:$0xf]
  %v42 = vld [vmem:[%s1 + $0x38] sm:$0xf]
  %v43 = vld [vmem:[%s1 + $0x3c] sm:$0xf]
  %v44 = vld [vmem:[%s1 + $0x40] sm:$0xf]
  %v45 = vld [vmem:[%s1 + $0x44] sm:$0xf]
  %v46 = vld [vmem:[%s1 + $0x48] sm:$0xf]
  %v47 = vld [vmem:[%s1 + $0x4c] sm:$0xf]
  %v48 = vld [vmem:[%s1 + $0x50] sm:$0xf]
  %v49 = vld [vmem:[%s1 + $0x54] sm:$0xf]
  %v50 = vld [vmem:[%s1 + $0x58] sm:$0xf]
  %v51 = vld [vmem:[%s1 + $0x5c] sm:$0xf]
  %v52 = vld [vmem:[%s1 + $0x60] sm:$0xf]
  %v53 = vld [vmem:[%s1 + $0x64] sm:$0xf]
  %v54 = vld [vmem:[%s1 + $0x68] sm:$0xf]
  %v55 = vld [vmem:[%s1 + $0x6c] sm:$0xf]
  %v56 = vld [vmem:[%s1 + $0x70] sm:$0xf]
  %v57 = vld [vmem:[%s1 + $0x74] sm:$0xf]
  %v58 = vld [vmem:[%s1 + $0x78] sm:$0xf]
  %v59 = vld [vmem:[%s1 + $0x7c] sm:$0xf]
  %v60 = vld [vmem:[%s2] sm:$0x1]
  %v62 = vlaneseq
  %v63 = vshrl.u32 %v62, 7
  %v64 = vsub.s32 0, %v63
  %v65 = vrot.slane %v60, %v64
  %v80 = vunpack.c.l.b16 %v15
  %v81 = vunpack.c.h.b16 %v15
  %v82 = vunpack.c.l.b16 %v16
  %v83 = vunpack.c.h.b16 %v16
  %v84 = vunpack.c.l.b16 %v17
  %v85 = vunpack.c.h.b16 %v17
  %v86 = vunpack.c.l.b16 %v18
  %v87 = vunpack.c.h.b16 %v18
  %v88 = vunpack.c.l.b16 %v19
  %v89 = vunpack.c.h.b16 %v19
  %v90 = vunpack.c.l.b16 %v20
  %v91 = vunpack.c.h.b16 %v20
  %v92 = vunpack.c.l.b16 %v21
  %v93 = vunpack.c.h.b16 %v21
  %v94 = vunpack.c.l.b16 %v22
  %v95 = vunpack.c.h.b16 %v22
  %v96 = vunpack.c.l.b16 %v23
  %v97 = vunpack.c.h.b16 %v23
  %v98 = vunpack.c.l.b16 %v24
  %v99 = vunpack.c.h.b16 %v24
  %v100 = vunpack.c.l.b16 %v25
  %v101 = vunpack.c.h.b16 %v25
  %v102 = vunpack.c.l.b16 %v26
  %v103 = vunpack.c.h.b16 %v26
  %v104 = vunpack.c.l.b16 %v27
  %v105 = vunpack.c.h.b16 %v27
  %v106 = vpack.c.b16 %v82, %v80
  %v107 = vpack.c.b16 %v83, %v81
  %v108 = vpack.c.b16 %v86, %v84
  %v109 = vpack.c.b16 %v87, %v85
  %v110 = vpack.c.b16 %v90, %v88
  %v111 = vpack.c.b16 %v91, %v89
  %v112 = vpack.c.b16 %v94, %v92
  %v113 = vpack.c.b16 %v95, %v93
  %v114 = vpack.c.b16 %v98, %v96
  %v115 = vpack.c.b16 %v99, %v97
  %v116 = vpack.c.b16 %v102, %v100
  %v117 = vpack.c.b16 %v103, %v101
  %v118 = vpack.c.b16 %v104, %v104
  %v119 = vpack.c.b16 %v105, %v105
  %v166 = vunpack.c.l.b16 %v28
  %v167 = vunpack.c.l.b16 %v29
  %v168 = vunpack.c.l.b16 %v30
  %v169 = vunpack.c.l.b16 %v31
  %v170 = vunpack.c.l.b16 %v32
  %v171 = vunpack.c.l.b16 %v33
  %v172 = vunpack.c.l.b16 %v34
  %v173 = vunpack.c.l.b16 %v35
  %v174 = vunpack.c.l.b16 %v36
  %v175 = vunpack.c.l.b16 %v37
  %v176 = vunpack.c.l.b16 %v38
  %v177 = vunpack.c.l.b16 %v39
  %v178 = vunpack.c.l.b16 %v40
  %v179 = vunpack.c.l.b16 %v41
  %v180 = vunpack.c.l.b16 %v42
  %v181 = vunpack.c.l.b16 %v43
  %v182 = vunpack.c.l.b16 %v44
  %v183 = vunpack.c.l.b16 %v45
  %v184 = vunpack.c.l.b16 %v46
  %v185 = vunpack.c.l.b16 %v47
  %v186 = vunpack.c.l.b16 %v48
  %v187 = vunpack.c.l.b16 %v49
  %v188 = vunpack.c.l.b16 %v50
  %v189 = vunpack.c.l.b16 %v51
  %v190 = vunpack.c.l.b16 %v52
  %v191 = vunpack.c.l.b16 %v53
  %v192 = vunpack.c.l.b16 %v54
  %v193 = vunpack.c.l.b16 %v55
  %v194 = vunpack.c.l.b16 %v56
  %v195 = vunpack.c.l.b16 %v57
  %v196 = vunpack.c.l.b16 %v58
  %v197 = vunpack.c.l.b16 %v59
  %v198 = vpack.c.b16 %v167, %v166
  %v199 = vpack.c.b16 %v169, %v168
  %v200 = vpack.c.b16 %v171, %v170
  %v201 = vpack.c.b16 %v173, %v172
  %v202 = vpack.c.b16 %v175, %v174
  %v203 = vpack.c.b16 %v177, %v176
  %v204 = vpack.c.b16 %v179, %v178
  %v205 = vpack.c.b16 %v181, %v180
  %v206 = vpack.c.b16 %v183, %v182
  %v207 = vpack.c.b16 %v185, %v184
  %v208 = vpack.c.b16 %v187, %v186
  %v209 = vpack.c.b16 %v189, %v188
  %v210 = vpack.c.b16 %v191, %v190
  %v211 = vpack.c.b16 %v193, %v192
  %v212 = vpack.c.b16 %v195, %v194
  %v213 = vpack.c.b16 %v197, %v196
  %230 = vmatprep.subr.bf16.mxu0 0
  %231 = vmatpush1.bf16.msra.mxu0 %v198
  %232 = vmatprep.subr.bf16.mxu0 0
  %233 = vmatpush1.bf16.msra.mxu0 %v199
  %234 = vmatprep.subr.bf16.mxu0 0
  %235 = vmatpush1.bf16.msra.mxu0 %v200
  %236 = vmatprep.subr.bf16.mxu0 0
  %237 = vmatpush1.bf16.msra.mxu0 %v201
  %238 = vmatprep.subr.bf16.mxu0 0
  %239 = vmatpush1.bf16.msra.mxu0 %v202
  %240 = vmatprep.subr.bf16.mxu0 0
  %241 = vmatpush1.bf16.msra.mxu0 %v203
  %242 = vmatprep.subr.bf16.mxu0 0
  %243 = vmatpush1.bf16.msra.mxu0 %v204
  %244 = vmatprep.subr.bf16.mxu0 0
  %245 = vmatpush1.bf16.msra.mxu0 %v205
  %246 = vmatprep.subr.bf16.mxu0 0
  %247 = vmatpush1.bf16.msra.mxu0 %v206
  %248 = vmatprep.subr.bf16.mxu0 0
  %249 = vmatpush1.bf16.msra.mxu0 %v207
  %250 = vmatprep.subr.bf16.mxu0 0
  %251 = vmatpush1.bf16.msra.mxu0 %v208
  %252 = vmatprep.subr.bf16.mxu0 0
  %253 = vmatpush1.bf16.msra.mxu0 %v209
  %254 = vmatprep.subr.bf16.mxu0 0
  %255 = vmatpush1.bf16.msra.mxu0 %v210
  %256 = vmatprep.subr.bf16.mxu0 0
  %257 = vmatpush1.bf16.msra.mxu0 %v211
  %258 = vmatprep.subr.bf16.mxu0 0
  %259 = vmatpush1.bf16.msra.mxu0 %v212
  %260 = vmatprep.subr.bf16.mxu0 0
  %261 = vmatpush1.bf16.msra.mxu0 %v213
  %262 = vmatprep.mubr.bf16.mxu0 %v107
  %263 = vmatmul.mubr.bf16.gmra.mrb[0].mxu0 %v106
  %v264 = vpop.f32.mrb[0].mxu0
  %v265 = vadd.f32 %v65, %v264
  %v266 = vpop.f32.mrb[0].mxu0
  %v267 = vpop.f32.mrb[0].mxu0
  %v268 = vadd.f32 %v65, %v267
  %v269 = vpop.f32.mrb[0].mxu0
  %270 = vmatprep.mubr.bf16.mxu0 %v109
  %271 = vmatmul.mubr.bf16.gmra.mrb[0].mxu0 %v108
  %v272 = vpop.f32.mrb[0].mxu0
  %v273 = vadd.f32 %v65, %v272
  %v274 = vpop.f32.mrb[0].mxu0
  %v275 = vpop.f32.mrb[0].mxu0
  %v276 = vadd.f32 %v65, %v275
  %v277 = vpop.f32.mrb[0].mxu0
  %278 = vmatprep.mubr.bf16.mxu0 %v111
  %279 = vmatmul.mubr.bf16.gmra.mrb[0].mxu0 %v110
  %v280 = vpop.f32.mrb[0].mxu0
  %v281 = vadd.f32 %v65, %v280
  %v282 = vpop.f32.mrb[0].mxu0
  %v283 = vpop.f32.mrb[0].mxu0
  %v284 = vadd.f32 %v65, %v283
  %v285 = vpop.f32.mrb[0].mxu0
  %286 = vmatprep.mubr.bf16.mxu0 %v113
  %287 = vmatmul.mubr.bf16.gmra.mrb[0].mxu0 %v112
  %v288 = vpop.f32.mrb[0].mxu0
  %v289 = vadd.f32 %v65, %v288
  %v290 = vpop.f32.mrb[0].mxu0
  %v291 = vpop.f32.mrb[0].mxu0
  %v292 = vadd.f32 %v65, %v291
  %v293 = vpop.f32.mrb[0].mxu0
  %294 = vmatprep.mubr.bf16.mxu0 %v115
  %295 = vmatmul.mubr.bf16.gmra.mrb[0].mxu0 %v114
  %v296 = vpop.f32.mrb[0].mxu0
  %v297 = vadd.f32 %v65, %v296
  %v298 = vpop.f32.mrb[0].mxu0
  %v299 = vpop.f32.mrb[0].mxu0
  %v300 = vadd.f32 %v65, %v299
  %v301 = vpop.f32.mrb[0].mxu0
  %302 = vmatprep.mubr.bf16.mxu0 %v117
  %303 = vmatmul.mubr.bf16.gmra.mrb[0].mxu0 %v116
  %v304 = vpop.f32.mrb[0].mxu0
  %v305 = vadd.f32 %v65, %v304
  %v306 = vpop.f32.mrb[0].mxu0
  %v307 = vpop.f32.mrb[0].mxu0
  %v308 = vadd.f32 %v65, %v307
  %v309 = vpop.f32.mrb[0].mxu0
  %310 = vmatprep.mubr.bf16.mxu0 %v119
  %311 = vmatmul.mubr.bf16.gmra.mrb[0].mxu0 %v118
  %v312 = vpop.f32.mrb[0].mxu0
  %v313 = vadd.f32 %v65, %v312
  %v314 = vpop.f32.mrb[0].mxu0
  %v315 = vpop.f32.mrb[0].mxu0
  %v316 = vpop.f32.mrb[0].mxu0
  %317 = vdwg.mxu0
  %v318 = vmax.f32 %v265, 0.0
  %v319 = vmax.f32 %v268, 0.0
  %v320 = vmax.f32 %v273, 0.0
  %v321 = vmax.f32 %v276, 0.0
  %v322 = vmax.f32 %v281, 0.0
  %v323 = vmax.f32 %v284, 0.0
  %v324 = vmax.f32 %v289, 0.0
  %v325 = vmax.f32 %v292, 0.0
  %v326 = vmax.f32 %v297, 0.0
  %v327 = vmax.f32 %v300, 0.0
  %v328 = vmax.f32 %v305, 0.0
  %v329 = vmax.f32 %v308, 0.0
  %v330 = vmax.f32 %v313, 0.0
  %331 = vst [vmem:[%s3] sm:$0xff] %v318
  %332 = vst [vmem:[%s3 + $0x8] sm:$0xff] %v319
  %333 = vst [vmem:[%s3 + $0x10] sm:$0xff] %v320
  %334 = vst [vmem:[%s3 + $0x18] sm:$0xff] %v321
  %335 = vst [vmem:[%s3 + $0x20] sm:$0xff] %v322
  %336 = vst [vmem:[%s3 + $0x28] sm:$0xff] %v323
  %337 = vst [vmem:[%s3 + $0x30] sm:$0xff] %v324
  %338 = vst [vmem:[%s3 + $0x38] sm:$0xff] %v325
  %339 = vst [vmem:[%s3 + $0x40] sm:$0xff] %v326
  %340 = vst [vmem:[%s3 + $0x48] sm:$0xff] %v327
  %341 = vst [vmem:[%s3 + $0x50] sm:$0xff] %v328
  %342 = vst [vmem:[%s3 + $0x58] sm:$0xff] %v329
  %343 = vst [vmem:[%s3 + $0x60] sm:$0xff] %v330
  // Predicated region
  $region14: #{forward.5} parent=0 // pred_check
    _
  $region15: #{forward.5} parent=0 // pred_check_branch
    %345 = sbr.rel (0) target = $region17
  $region16: #{forward.5} parent=0 // pred_region
    _
  $region17: #{forward.5} parent=0 // pred_fallthru
    _
  // Predicated region
  $region18: #{forward.5} parent=0 // pred_check
    _
  $region19: #{forward.5} parent=0 // pred_check_branch
    %347 = sbr.rel (0) target = $region21
  $region20: #{forward.5} parent=0 // pred_region
    _
  $region21: #{forward.5} parent=0 // pred_fallthru
    _

// kernel: forward.6
$region0: #{forward.6}
  #allocation0 [shape = 'u32[]', space=smem, size = 0x4, offset = 0x4, fixed_abs, tag = 'smem constant byte address 0x4 - core index']
  #allocation1 [shape = 'u32[144,128]{1,0:T(1,128)}', space=vmem, size = 0x12000, scoped, tag = 'internal scratch']
  %s0 = inlined_call_operand.vmem [shape: bf16[24,256], index: 0, kind: input, shape index: {}]
  %s1 = inlined_call_operand.vmem [shape: bf16[256,128], index: 1, kind: input, shape index: {}]
  %s2 = inlined_call_operand.vmem [shape: f32[1,128], index: 2, kind: input, shape index: {}]
  %s3 = inlined_call_operand.vmem [shape: f32[24,128], index: 3, kind: output, shape index: {}]
  %s4 = sld [smem:[#allocation0]]
  $region22: #{forward.6} parent=0
    _
  %s6 = ssub.s32 1, %s4
  %s7 = scalar_select 0, %s6, %s4
  // Predicated region
  $region2: #{forward.6} parent=0 // pred_check
    _
  $region3: #{forward.6} parent=0 // pred_check_branch
    %9 = sbr.rel (0) target = $region5
  $region4: #{forward.6} parent=0 // pred_region
    _
  $region5: #{forward.6} parent=0 // pred_fallthru
    _
  // Predicated region
  $region6: #{forward.6} parent=0 // pred_check
    _
  $region7: #{forward.6} parent=0 // pred_check_branch
    %11 = sbr.rel (0) target = $region9
  $region8: #{forward.6} parent=0 // pred_region
    _
  $region9: #{forward.6} parent=0 // pred_fallthru
    _
  // Predicated region
  $region10: #{forward.6} parent=0 // pred_check
    _
  $region11: #{forward.6} parent=0 // pred_check_branch
    %13 = sbr.rel (0) target = $region13
  $region12: #{forward.6} parent=0 // pred_region
    _
  $region13: #{forward.6} parent=0 // pred_fallthru
    _
  %v15 = vld [vmem:[%s0] sm:$0xff]
  %v16 = vld [vmem:[%s0 + $0x8] sm:$0xff]
  %v17 = vld [vmem:[%s0 + $0x10] sm:$0xff]
  %v18 = vld [vmem:[%s1] sm:$0xf]
  %v19 = vld [vmem:[%s1 + $0x4] sm:$0xf]
  %v20 = vld [vmem:[%s1 + $0x8] sm:$0xf]
  %v21 = vld [vmem:[%s1 + $0xc] sm:$0xf]
  %v22 = vld [vmem:[%s1 + $0x10] sm:$0xf]
  %v23 = vld [vmem:[%s1 + $0x14] sm:$0xf]
  %v24 = vld [vmem:[%s1 + $0x18] sm:$0xf]
  %v25 = vld [vmem:[%s1 + $0x1c] sm:$0xf]
  %v26 = vld [vmem:[%s1 + $0x20] sm:$0xf]
  %v27 = vld [vmem:[%s1 + $0x24] sm:$0xf]
  %v28 = vld [vmem:[%s1 + $0x28] sm:$0xf]
  %v29 = vld [vmem:[%s1 + $0x2c] sm:$0xf]
  %v30 = vld [vmem:[%s1 + $0x30] sm:$0xf]
  %v31 = vld [vmem:[%s1 + $0x34] sm:$0xf]
  %v32 = vld [vmem:[%s1 + $0x38] sm:$0xf]
  %v33 = vld [vmem:[%s1 + $0x3c] sm:$0xf]
  %v34 = vld [vmem:[%s1 + $0x40] sm:$0xf]
  %v35 = vld [vmem:[%s1 + $0x44] sm:$0xf]
  %v36 = vld [vmem:[%s1 + $0x48] sm:$0xf]
  %v37 = vld [vmem:[%s1 + $0x4c] sm:$0xf]
  %v38 = vld [vmem:[%s1 + $0x50] sm:$0xf]
  %v39 = vld [vmem:[%s1 + $0x54] sm:$0xf]
  %v40 = vld [vmem:[%s1 + $0x58] sm:$0xf]
  %v41 = vld [vmem:[%s1 + $0x5c] sm:$0xf]
  %v42 = vld [vmem:[%s1 + $0x60] sm:$0xf]
  %v43 = vld [vmem:[%s1 + $0x64] sm:$0xf]
  %v44 = vld [vmem:[%s1 + $0x68] sm:$0xf]
  %v45 = vld [vmem:[%s1 + $0x6c] sm:$0xf]
  %v46 = vld [vmem:[%s1 + $0x70] sm:$0xf]
  %v47 = vld [vmem:[%s1 + $0x74] sm:$0xf]
  %v48 = vld [vmem:[%s1 + $0x78] sm:$0xf]
  %v49 = vld [vmem:[%s1 + $0x7c] sm:$0xf]
  %v50 = vld [vmem:[%s2] sm:$0x1]
  %v52 = vlaneseq
  %v53 = vshrl.u32 %v52, 7
  %v54 = vsub.s32 0, %v53
  %v55 = vrot.slane %v50, %v54
  %v60 = vunpack.c.l.b16 %v15
  %v61 = vunpack.c.h.b16 %v15
  %v62 = vunpack.c.l.b16 %v16
  %v63 = vunpack.c.h.b16 %v16
  %v64 = vunpack.c.l.b16 %v17
  %v65 = vunpack.c.h.b16 %v17
  %v66 = vpack.c.b16 %v62, %v60
  %v67 = vpack.c.b16 %v63, %v61
  %v68 = vpack.c.b16 %v64, %v64
  %v69 = vpack.c.b16 %v65, %v65
  %v106 = vunpack.c.l.b16 %v18
  %v107 = vunpack.c.l.b16 %v19
  %v108 = vunpack.c.l.b16 %v20
  %v109 = vunpack.c.l.b16 %v21
  %v110 = vunpack.c.l.b16 %v22
  %v111 = vunpack.c.l.b16 %v23
  %v112 = vunpack.c.l.b16 %v24
  %v113 = vunpack.c.l.b16 %v25
  %v114 = vunpack.c.l.b16 %v26
  %v115 = vunpack.c.l.b16 %v27
  %v116 = vunpack.c.l.b16 %v28
  %v117 = vunpack.c.l.b16 %v29
  %v118 = vunpack.c.l.b16 %v30
  %v119 = vunpack.c.l.b16 %v31
  %v120 = vunpack.c.l.b16 %v32
  %v121 = vunpack.c.l.b16 %v33
  %v122 = vunpack.c.l.b16 %v34
  %v123 = vunpack.c.l.b16 %v35
  %v124 = vunpack.c.l.b16 %v36
  %v125 = vunpack.c.l.b16 %v37
  %v126 = vunpack.c.l.b16 %v38
  %v127 = vunpack.c.l.b16 %v39
  %v128 = vunpack.c.l.b16 %v40
  %v129 = vunpack.c.l.b16 %v41
  %v130 = vunpack.c.l.b16 %v42
  %v131 = vunpack.c.l.b16 %v43
  %v132 = vunpack.c.l.b16 %v44
  %v133 = vunpack.c.l.b16 %v45
  %v134 = vunpack.c.l.b16 %v46
  %v135 = vunpack.c.l.b16 %v47
  %v136 = vunpack.c.l.b16 %v48
  %v137 = vunpack.c.l.b16 %v49
  %v138 = vpack.c.b16 %v107, %v106
  %v139 = vpack.c.b16 %v109, %v108
  %v140 = vpack.c.b16 %v111, %v110
  %v141 = vpack.c.b16 %v113, %v112
  %v142 = vpack.c.b16 %v115, %v114
  %v143 = vpack.c.b16 %v117, %v116
  %v144 = vpack.c.b16 %v119, %v118
  %v145 = vpack.c.b16 %v121, %v120
  %v146 = vpack.c.b16 %v123, %v122
  %v147 = vpack.c.b16 %v125, %v124
  %v148 = vpack.c.b16 %v127, %v126
  %v149 = vpack.c.b16 %v129, %v128
  %v150 = vpack.c.b16 %v131, %v130
  %v151 = vpack.c.b16 %v133, %v132
  %v152 = vpack.c.b16 %v135, %v134
  %v153 = vpack.c.b16 %v137, %v136
  %170 = vmatprep.subr.bf16.mxu0 0
  %171 = vmatpush1.bf16.msra.mxu0 %v138
  %172 = vmatprep.subr.bf16.mxu0 0
  %173 = vmatpush1.bf16.msra.mxu0 %v139
  %174 = vmatprep.subr.bf16.mxu0 0
  %175 = vmatpush1.bf16.msra.mxu0 %v140
  %176 = vmatprep.subr.bf16.mxu0 0
  %177 = vmatpush1.bf16.msra.mxu0 %v141
  %178 = vmatprep.subr.bf16.mxu0 0
  %179 = vmatpush1.bf16.msra.mxu0 %v142
  %180 = vmatprep.subr.bf16.mxu0 0
  %181 = vmatpush1.bf16.msra.mxu0 %v143
  %182 = vmatprep.subr.bf16.mxu0 0
  %183 = vmatpush1.bf16.msra.mxu0 %v144
  %184 = vmatprep.subr.bf16.mxu0 0
  %185 = vmatpush1.bf16.msra.mxu0 %v145
  %186 = vmatprep.subr.bf16.mxu0 0
  %187 = vmatpush1.bf16.msra.mxu0 %v146
  %188 = vmatprep.subr.bf16.mxu0 0
  %189 = vmatpush1.bf16.msra.mxu0 %v147
  %190 = vmatprep.subr.bf16.mxu0 0
  %191 = vmatpush1.bf16.msra.mxu0 %v148
  %192 = vmatprep.subr.bf16.mxu0 0
  %193 = vmatpush1.bf16.msra.mxu0 %v149
  %194 = vmatprep.subr.bf16.mxu0 0
  %195 = vmatpush1.bf16.msra.mxu0 %v150
  %196 = vmatprep.subr.bf16.mxu0 0
  %197 = vmatpush1.bf16.msra.mxu0 %v151
  %198 = vmatprep.subr.bf16.mxu0 0
  %199 = vmatpush1.bf16.msra.mxu0 %v152
  %200 = vmatprep.subr.bf16.mxu0 0
  %201 = vmatpush1.bf16.msra.mxu0 %v153
  %202 = vmatprep.mubr.bf16.mxu0 %v67
  %203 = vmatmul.mubr.bf16.gmra.mrb[0].mxu0 %v66
  %v204 = vpop.f32.mrb[0].mxu0
  %v205 = vadd.f32 %v55, %v204
  %v206 = vpop.f32.mrb[0].mxu0
  %v207 = vpop.f32.mrb[0].mxu0
  %v208 = vadd.f32 %v55, %v207
  %v209 = vpop.f32.mrb[0].mxu0
  %210 = vmatprep.mubr.bf16.mxu0 %v69
  %211 = vmatmul.mubr.bf16.gmra.mrb[0].mxu0 %v68
  %v212 = vpop.f32.mrb[0].mxu0
  %v213 = vadd.f32 %v55, %v212
  %v214 = vpop.f32.mrb[0].mxu0
  %v215 = vpop.f32.mrb[0].mxu0
  %v216 = vpop.f32.mrb[0].mxu0
  %217 = vdwg.mxu0
  %218 = vst [vmem:[%s3] sm:$0xff] %v205
  %219 = vst [vmem:[%s3 + $0x8] sm:$0xff] %v208
  %220 = vst [vmem:[%s3 + $0x10] sm:$0xff] %v213
  // Predicated region
  $region14: #{forward.6} parent=0 // pred_check
    _
  $region15: #{forward.6} parent=0 // pred_check_branch
    %222 = sbr.rel (0) target = $region17
  $region16: #{forward.6} parent=0 // pred_region
    _
  $region17: #{forward.6} parent=0 // pred_fallthru
    _
  // Predicated region
  $region18: #{forward.6} parent=0 // pred_check
    _
  $region19: #{forward.6} parent=0 // pred_check_branch
    %224 = sbr.rel (0) target = $region21
  $region20: #{forward.6} parent=0 // pred_region
    _
  $region21: #{forward.6} parent=0 // pred_fallthru
    _

// kernel: forward.7
$region0: #{forward.7}
  #allocation0 [shape = 'u32[]', space=smem, size = 0x4, offset = 0x4, fixed_abs, tag = 'smem constant byte address 0x4 - core index']
  #allocation1 [shape = 'u32[144,128]{1,0:T(1,128)}', space=vmem, size = 0x12000, scoped, tag = 'internal scratch']
  #allocation2 [shape = 'f32[1,1]{1,0:T(1,128)S(1)}', space=vmem, size = 0x200, scoped, tag = 'scoped memory for forward.7']
  %s0 = inlined_call_operand.vmem [shape: f32[40,128], index: 0, kind: input, shape index: {}]
  %s1 = inlined_call_operand.vmem [shape: f32[8,128], index: 1, kind: input, shape index: {}]
  %s2 = inlined_call_operand.vmem [shape: bf16[128,128], index: 2, kind: input, shape index: {}]
  %s3 = inlined_call_operand.vmem [shape: f32[1,128], index: 3, kind: input, shape index: {}]
  %s4 = inlined_call_operand.vmem [shape: bf16[128,128], index: 4, kind: input, shape index: {}]
  %s5 = inlined_call_operand.vmem [shape: f32[1,128], index: 5, kind: input, shape index: {}]
  %s6 = inlined_call_operand.vmem [shape: f32[1,128], index: 6, kind: input, shape index: {}]
  %s7 = inlined_call_operand.vmem [shape: f32[1,128], index: 7, kind: input, shape index: {}]
  %s8 = inlined_call_operand.<no memory space> [shape: f32[1,1], index: 8, kind: input, shape index: {}]
  %s9 = inlined_call_operand.vmem [shape: bf16[384,128], index: 9, kind: input, shape index: {}]
  %s10 = inlined_call_operand.vmem [shape: f32[1,128], index: 10, kind: input, shape index: {}]
  %s11 = inlined_call_operand.vmem [shape: bf16[128,128], index: 11, kind: input, shape index: {}]
  %s12 = inlined_call_operand.vmem [shape: f32[1,128], index: 12, kind: input, shape index: {}]
  %s13 = inlined_call_operand.hbm [shape: f32[8,128], index: 13, kind: output, shape index: {}]
  %s14 = sld [smem:[#allocation0]]
  $region62: #{forward.7} parent=0
    _
  %s16 = ssub.s32 1, %s14
  %s17 = scalar_select 0, %s16, %s14
  %v18 = vstv %s8
  %19 = vst [vmem:[#allocation2] sm:$0x1] %v18
  $region1: #{forward.7} parent=0
    #allocation3 [shape = 'u8[4096]{0}', space=vmem, size = 0x1000, scoped, tag = 'output window, operand 0, single buffered']
    #allocation4 [shape = 's32[1]{0}', space=sflag, size = 0x4, scoped, tag = 'scoped memory for forward.7']
    %20 = vsyncpa [#allocation4], 0
    // Predicated region
    $region2: #{forward.7} parent=1 // pred_check
      _
    $region3: #{forward.7} parent=1 // pred_check_branch
      %22 = sbr.rel (0) target = $region5
    $region4: #{forward.7} parent=1 // pred_region
      _
    $region5: #{forward.7} parent=1 // pred_fallthru
      _
    // Predicated region
    $region6: #{forward.7} parent=1 // pred_check
      _
    $region7: #{forward.7} parent=1 // pred_check_branch
      %24 = sbr.rel (0) target = $region9
    $region8: #{forward.7} parent=1 // pred_region
      _
    $region9: #{forward.7} parent=1 // pred_fallthru
      _
    // Predicated region
    $region10: #{forward.7} parent=1 // pred_check
      _
    $region11: #{forward.7} parent=1 // pred_check_branch
      %26 = sbr.rel (0) target = $region13
    $region12: #{forward.7} parent=1 // pred_region
      _
    $region13: #{forward.7} parent=1 // pred_fallthru
      _
    // Predicated region
    $region14: #{forward.7} parent=1 // pred_check
      _
    $region15: #{forward.7} parent=1 // pred_check_branch
      %28 = sbr.rel (0) target = $region17
    $region16: #{forward.7} parent=1 // pred_region
      _
    $region17: #{forward.7} parent=1 // pred_fallthru
      _
    // Predicated region
    $region18: #{forward.7} parent=1 // pred_check
      _
    $region19: #{forward.7} parent=1 // pred_check_branch
      %30 = sbr.rel (0) target = $region21
    $region20: #{forward.7} parent=1 // pred_region
      _
    $region21: #{forward.7} parent=1 // pred_fallthru
      _
    // Predicated region
    $region22: #{forward.7} parent=1 // pred_check
      _
    $region23: #{forward.7} parent=1 // pred_check_branch
      %32 = sbr.rel (0) target = $region25
    $region24: #{forward.7} parent=1 // pred_region
      _
    $region25: #{forward.7} parent=1 // pred_fallthru
      _
    // Predicated region
    $region26: #{forward.7} parent=1 // pred_check
      _
    $region27: #{forward.7} parent=1 // pred_check_branch
      %34 = sbr.rel (0) target = $region29
    $region28: #{forward.7} parent=1 // pred_region
      _
    $region29: #{forward.7} parent=1 // pred_fallthru
      _
    // Predicated region
    $region30: #{forward.7} parent=1 // pred_check
      _
    $region31: #{forward.7} parent=1 // pred_check_branch
      %36 = sbr.rel (0) target = $region33
    $region32: #{forward.7} parent=1 // pred_region
      _
    $region33: #{forward.7} parent=1 // pred_fallthru
      _
    // Predicated region
    $region34: #{forward.7} parent=1 // pred_check
      _
    $region35: #{forward.7} parent=1 // pred_check_branch
      %38 = sbr.rel (0) target = $region37
    $region36: #{forward.7} parent=1 // pred_region
      _
    $region37: #{forward.7} parent=1 // pred_fallthru
      _
    // Predicated region
    $region38: #{forward.7} parent=1 // pred_check
      _
    $region39: #{forward.7} parent=1 // pred_check_branch
      %40 = sbr.rel (0) target = $region41
    $region40: #{forward.7} parent=1 // pred_region
      _
    $region41: #{forward.7} parent=1 // pred_fallthru
      _
    // Predicated region
    $region42: #{forward.7} parent=1 // pred_check
      _
    $region43: #{forward.7} parent=1 // pred_check_branch
      %42 = sbr.rel (0) target = $region45
    $region44: #{forward.7} parent=1 // pred_region
      _
    $region45: #{forward.7} parent=1 // pred_fallthru
      _
    // Predicated region
    $region46: #{forward.7} parent=1 // pred_check
      _
    $region47: #{forward.7} parent=1 // pred_check_branch
      %44 = sbr.rel (0) target = $region49
    $region48: #{forward.7} parent=1 // pred_region
      _
    $region49: #{forward.7} parent=1 // pred_fallthru
      _
    // Predicated region
    $region50: #{forward.7} parent=1 // pred_check
      _
    $region51: #{forward.7} parent=1 // pred_check_branch
      %46 = sbr.rel (0) target = $region53
    $region52: #{forward.7} parent=1 // pred_region
      _
    $region53: #{forward.7} parent=1 // pred_fallthru
      _
    %v48 = vld [vmem:[%s0] sm:$0xff]
    %v49 = vld [vmem:[%s0 + $0x8] sm:$0xff]
    %v50 = vld [vmem:[%s0 + $0x10] sm:$0xff]
    %v51 = vld [vmem:[%s0 + $0x18] sm:$0xff]
    %v52 = vld [vmem:[%s0 + $0x20] sm:$0xff]
    %v53 = vpack.c.bf16 %v49, %v48
    %v54 = vpack.c.bf16 %v51, %v50
    %v55 = vpack.c.bf16 %v52, %v52
    %v56 = vld [vmem:[%s2] sm:$0xf]
    %v57 = vld [vmem:[%s2 + $0x4] sm:$0xf]
    %v58 = vld [vmem:[%s2 + $0x8] sm:$0xf]
    %v59 = vld [vmem:[%s2 + $0xc] sm:$0xf]
    %v60 = vld [vmem:[%s2 + $0x10] sm:$0xf]
    %v61 = vld [vmem:[%s2 + $0x14] sm:$0xf]
    %v62 = vld [vmem:[%s2 + $0x18] sm:$0xf]
    %v63 = vld [vmem:[%s2 + $0x1c] sm:$0xf]
    %v64 = vld [vmem:[%s2 + $0x20] sm:$0xf]
    %v65 = vld [vmem:[%s2 + $0x24] sm:$0xf]
    %v66 = vld [vmem:[%s2 + $0x28] sm:$0xf]
    %v67 = vld [vmem:[%s2 + $0x2c] sm:$0xf]
    %v68 = vld [vmem:[%s2 + $0x30] sm:$0xf]
    %v69 = vld [vmem:[%s2 + $0x34] sm:$0xf]
    %v70 = vld [vmem:[%s2 + $0x38] sm:$0xf]
    %v71 = vld [vmem:[%s2 + $0x3c] sm:$0xf]
    %v72 = vld [vmem:[%s3] sm:$0x1]
    %v74 = vlaneseq
    %v75 = vshrl.u32 %v74, 7
    %v76 = vsub.s32 0, %v75
    %v77 = vrot.slane %v72, %v76
    %v95 = vunpack.c.l.b16 %v56
    %v96 = vunpack.c.l.b16 %v57
    %v97 = vunpack.c.l.b16 %v58
    %v98 = vunpack.c.l.b16 %v59
    %v99 = vunpack.c.l.b16 %v60
    %v100 = vunpack.c.l.b16 %v61
    %v101 = vunpack.c.l.b16 %v62
    %v102 = vunpack.c.l.b16 %v63
    %v103 = vunpack.c.l.b16 %v64
    %v104 = vunpack.c.l.b16 %v65
    %v105 = vunpack.c.l.b16 %v66
    %v106 = vunpack.c.l.b16 %v67
    %v107 = vunpack.c.l.b16 %v68
    %v108 = vunpack.c.l.b16 %v69
    %v109 = vunpack.c.l.b16 %v70
    %v110 = vunpack.c.l.b16 %v71
    %v111 = vpack.c.b16 %v96, %v95
    %v112 = vpack.c.b16 %v98, %v97
    %v113 = vpack.c.b16 %v100, %v99
    %v114 = vpack.c.b16 %v102, %v101
    %v115 = vpack.c.b16 %v104, %v103
    %v116 = vpack.c.b16 %v106, %v105
    %v117 = vpack.c.b16 %v108, %v107
    %v118 = vpack.c.b16 %v110, %v109
    %127 = vmatprep.subr.bf16.mxu0 0
    %128 = vmatpush1.bf16.msra.mxu0 %v111
    %129 = vmatprep.subr.bf16.mxu0 0
    %130 = vmatpush1.bf16.msra.mxu0 %v112
    %131 = vmatprep.subr.bf16.mxu0 0
    %132 = vmatpush1.bf16.msra.mxu0 %v113
    %133 = vmatprep.subr.bf16.mxu0 0
    %134 = vmatpush1.bf16.msra.mxu0 %v114
    %135 = vmatprep.subr.bf16.mxu0 0
    %136 = vmatpush1.bf16.msra.mxu0 %v115
    %137 = vmatprep.subr.bf16.mxu0 0
    %138 = vmatpush1.bf16.msra.mxu0 %v116
    %139 = vmatprep.subr.bf16.mxu0 0
    %140 = vmatpush1.bf16.msra.mxu0 %v117
    %141 = vmatprep.subr.bf16.mxu0 0
    %142 = vmatpush1.bf16.msra.mxu0 %v118
    %143 = vmatprep.subr.bf16.mxu0 0
    %144 = vmatpush1.bf16.msra.mxu0 0
    %145 = vmatprep.subr.bf16.mxu0 0
    %146 = vmatpush1.bf16.msra.mxu0 0
    %147 = vmatprep.subr.bf16.mxu0 0
    %148 = vmatpush1.bf16.msra.mxu0 0
    %149 = vmatprep.subr.bf16.mxu0 0
    %150 = vmatpush1.bf16.msra.mxu0 0
    %151 = vmatprep.subr.bf16.mxu0 0
    %152 = vmatpush1.bf16.msra.mxu0 0
    %153 = vmatprep.subr.bf16.mxu0 0
    %154 = vmatpush1.bf16.msra.mxu0 0
    %155 = vmatprep.subr.bf16.mxu0 0
    %156 = vmatpush1.bf16.msra.mxu0 0
    %157 = vmatprep.subr.bf16.mxu0 0
    %158 = vmatpush1.bf16.msra.mxu0 0
    %159 = vmatprep.mubr.bf16.mxu0 0
    %160 = vmatmul.mubr.bf16.gmra.mrb[0].mxu0 %v53
    %v161 = vpop.f32.mrb[0].mxu0
    %v162 = vadd.f32 %v77, %v161
    %v163 = vpop.f32.mrb[0].mxu0
    %v164 = vpop.f32.mrb[0].mxu0
    %v165 = vadd.f32 %v77, %v164
    %v166 = vpop.f32.mrb[0].mxu0
    %167 = vmatprep.mubr.bf16.mxu0 0
    %168 = vmatmul.mubr.bf16.gmra.mrb[0].mxu0 %v54
    %v169 = vpop.f32.mrb[0].mxu0
    %v170 = vadd.f32 %v77, %v169
    %v171 = vpop.f32.mrb[0].mxu0
    %v172 = vpop.f32.mrb[0].mxu0
    %v173 = vadd.f32 %v77, %v172
    %v174 = vpop.f32.mrb[0].mxu0
    %175 = vmatprep.mubr.bf16.mxu0 0
    %176 = vmatmul.mubr.bf16.gmra.mrb[0].mxu0 %v55
    %v177 = vpop.f32.mrb[0].mxu0
    %v178 = vadd.f32 %v77, %v177
    %v179 = vpop.f32.mrb[0].mxu0
    %v180 = vpop.f32.mrb[0].mxu0
    %v181 = vpop.f32.mrb[0].mxu0
    %182 = vdwg.mxu0
    %v183 = vmax.f32 %v162, 0.0
    %v184 = vmax.f32 %v165, 0.0
    %v185 = vmax.f32 %v170, 0.0
    %v186 = vmax.f32 %v173, 0.0
    %v187 = vmax.f32 %v178, 0.0
    %v188 = vpack.c.bf16 %v184, %v183
    %v189 = vpack.c.bf16 %v186, %v185
    %v190 = vpack.c.bf16 %v187, %v187
    %v191 = vld [vmem:[%s4] sm:$0xf]
    %v192 = vld [vmem:[%s4 + $0x4] sm:$0xf]
    %v193 = vld [vmem:[%s4 + $0x8] sm:$0xf]
    %v194 = vld [vmem:[%s4 + $0xc] sm:$0xf]
    %v195 = vld [vmem:[%s4 + $0x10] sm:$0xf]
    %v196 = vld [vmem:[%s4 + $0x14] sm:$0xf]
    %v197 = vld [vmem:[%s4 + $0x18] sm:$0xf]
    %v198 = vld [vmem:[%s4 + $0x1c] sm:$0xf]
    %v199 = vld [vmem:[%s4 + $0x20] sm:$0xf]
    %v200 = vld [vmem:[%s4 + $0x24] sm:$0xf]
    %v201 = vld [vmem:[%s4 + $0x28] sm:$0xf]
    %v202 = vld [vmem:[%s4 + $0x2c] sm:$0xf]
    %v203 = vld [vmem:[%s4 + $0x30] sm:$0xf]
    %v204 = vld [vmem:[%s4 + $0x34] sm:$0xf]
    %v205 = vld [vmem:[%s4 + $0x38] sm:$0xf]
    %v206 = vld [vmem:[%s4 + $0x3c] sm:$0xf]
    %v207 = vld [vmem:[%s5] sm:$0x1]
    %v209 = vlaneseq
    %v210 = vshrl.u32 %v209, 7
    %v211 = vsub.s32 0, %v210
    %v212 = vrot.slane %v207, %v211
    %v230 = vunpack.c.l.b16 %v191
    %v231 = vunpack.c.l.b16 %v192
    %v232 = vunpack.c.l.b16 %v193
    %v233 = vunpack.c.l.b16 %v194
    %v234 = vunpack.c.l.b16 %v195
    %v235 = vunpack.c.l.b16 %v196
    %v236 = vunpack.c.l.b16 %v197
    %v237 = vunpack.c.l.b16 %v198
    %v238 = vunpack.c.l.b16 %v199
    %v239 = vunpack.c.l.b16 %v200
    %v240 = vunpack.c.l.b16 %v201
    %v241 = vunpack.c.l.b16 %v202
    %v242 = vunpack.c.l.b16 %v203
    %v243 = vunpack.c.l.b16 %v204
    %v244 = vunpack.c.l.b16 %v205
    %v245 = vunpack.c.l.b16 %v206
    %v246 = vpack.c.b16 %v231, %v230
    %v247 = vpack.c.b16 %v233, %v232
    %v248 = vpack.c.b16 %v235, %v234
    %v249 = vpack.c.b16 %v237, %v236
    %v250 = vpack.c.b16 %v239, %v238
    %v251 = vpack.c.b16 %v241, %v240
    %v252 = vpack.c.b16 %v243, %v242
    %v253 = vpack.c.b16 %v245, %v244
    %262 = vmatprep.subr.bf16.mxu0 0
    %263 = vmatpush1.bf16.msra.mxu0 %v246
    %264 = vmatprep.subr.bf16.mxu0 0
    %265 = vmatpush1.bf16.msra.mxu0 %v247
    %266 = vmatprep.subr.bf16.mxu0 0
    %267 = vmatpush1.bf16.msra.mxu0 %v248
    %268 = vmatprep.subr.bf16.mxu0 0
    %269 = vmatpush1.bf16.msra.mxu0 %v249
    %270 = vmatprep.subr.bf16.mxu0 0
    %271 = vmatpush1.bf16.msra.mxu0 %v250
    %272 = vmatprep.subr.bf16.mxu0 0
    %273 = vmatpush1.bf16.msra.mxu0 %v251
    %274 = vmatprep.subr.bf16.mxu0 0
    %275 = vmatpush1.bf16.msra.mxu0 %v252
    %276 = vmatprep.subr.bf16.mxu0 0
    %277 = vmatpush1.bf16.msra.mxu0 %v253
    %278 = vmatprep.subr.bf16.mxu0 0
    %279 = vmatpush1.bf16.msra.mxu0 0
    %280 = vmatprep.subr.bf16.mxu0 0
    %281 = vmatpush1.bf16.msra.mxu0 0
    %282 = vmatprep.subr.bf16.mxu0 0
    %283 = vmatpush1.bf16.msra.mxu0 0
    %284 = vmatprep.subr.bf16.mxu0 0
    %285 = vmatpush1.bf16.msra.mxu0 0
    %286 = vmatprep.subr.bf16.mxu0 0
    %287 = vmatpush1.bf16.msra.mxu0 0
    %288 = vmatprep.subr.bf16.mxu0 0
    %289 = vmatpush1.bf16.msra.mxu0 0
    %290 = vmatprep.subr.bf16.mxu0 0
    %291 = vmatpush1.bf16.msra.mxu0 0
    %292 = vmatprep.subr.bf16.mxu0 0
    %293 = vmatpush1.bf16.msra.mxu0 0
    %294 = vmatprep.mubr.bf16.mxu0 0
    %295 = vmatmul.mubr.bf16.gmra.mrb[0].mxu0 %v188
    %v296 = vpop.f32.mrb[0].mxu0
    %v297 = vadd.f32 %v212, %v296
    %v298 = vpop.f32.mrb[0].mxu0
    %v299 = vpop.f32.mrb[0].mxu0
    %v300 = vadd.f32 %v212, %v299
    %v301 = vpop.f32.mrb[0].mxu0
    %302 = vmatprep.mubr.bf16.mxu0 0
    %303 = vmatmul.mubr.bf16.gmra.mrb[0].mxu0 %v189
    %v304 = vpop.f32.mrb[0].mxu0
    %v305 = vadd.f32 %v212, %v304
    %v306 = vpop.f32.mrb[0].mxu0
    %v307 = vpop.f32.mrb[0].mxu0
    %v308 = vadd.f32 %v212, %v307
    %v309 = vpop.f32.mrb[0].mxu0
    %310 = vmatprep.mubr.bf16.mxu0 0
    %311 = vmatmul.mubr.bf16.gmra.mrb[0].mxu0 %v190
    %v312 = vpop.f32.mrb[0].mxu0
    %v313 = vadd.f32 %v212, %v312
    %v314 = vpop.f32.mrb[0].mxu0
    %v315 = vpop.f32.mrb[0].mxu0
    %v316 = vpop.f32.mrb[0].mxu0
    %317 = vdwg.mxu0
    %v318 = vld [vmem:[%s6] sm:$0x1]
    %v319 = vld [vmem:[%s7] sm:$0x1]
    %v321 = vlaneseq
    %v322 = vshrl.u32 %v321, 7
    %v323 = vsub.s32 0, %v322
    %v324 = vrot.slane %v318, %v323
    %v326 = vmul.f32 %v297, %v324
    %327 = vadd.xlane.f32.xlu0 %v326
    %v328 = vpop.xlane.xlu0 %327
    %v329 = vld [vmem:[#allocation2] sm:$0x1]
    %v331 = vlaneseq
    %v332 = vshrl.u32 %v331, 7
    %v333 = vsub.s32 0, %v332
    %v334 = vrot.slane %v329, %v333
    %v336 = vadd.f32 %v328, %v334
    %v338 = vlaneseq
    %v339 = vshrl.u32 %v338, 7
    %v340 = vsub.s32 0, %v339
    %v341 = vrot.slane %v319, %v340
    %v343 = vmul.f32 %v300, %v341
    %344 = vadd.xlane.f32.xlu0 %v343
    %v345 = vpop.xlane.xlu0 %344
    %v346 = vadd.f32 %v345, %v336
    %v347 = vmul.f32 %v305, %v341
    %348 = vadd.xlane.f32.xlu0 %v347
    %v349 = vpop.xlane.xlu0 %348
    %v350 = vadd.f32 %v349, %v336
    %v351 = vmul.f32 %v308, %v341
    %352 = vadd.xlane.f32.xlu0 %v351
    %v353 = vpop.xlane.xlu0 %352
    %v354 = vadd.f32 %v353, %v336
    %v355 = vmul.f32 %v313, %v341
    %356 = vadd.xlane.f32.xlu0 %v355
    %v357 = vpop.xlane.xlu0 %356
    %v358 = vadd.f32 %v357, %v336
    %v359 = vmax.f32 %v346, %v350
    %v360 = vmax.f32 %v359, %v354
    %v361 = vmax.f32 %v360, %v358
    %v362 = vsub.f32 %v346, %v361
    %v363 = vmul.f32 %v362, 1.442695
    %v364 = vpow.pop %v363
    %v365 = vsub.f32 %v350, %v361
    %v366 = vmul.f32 %v365, 1.442695
    %v367 = vpow.pop %v366
    %v368 = vsub.f32 %v354, %v361
    %v369 = vmul.f32 %v368, 1.442695
    %v370 = vpow.pop %v369
    %v371 = vsub.f32 %v358, %v361
    %v372 = vmul.f32 %v371, 1.442695
    %v373 = vpow.pop %v372
    %v374 = vadd.f32 %v364, %v367
    %v375 = vadd.f32 %v374, %v370
    %v376 = vadd.f32 %v375, %v373
    %v377 = vrcp.pop %v376
    %v378 = vmul.f32 %v364, %v377
    %380 = vset.pattern.permute.xlu0 0
    %381 = vperm.xlu0 %380, %v378
    %v382 = vpop.permute.xlu0 %381
    %v384 = vmul.f32 %v382, %v300
    %v385 = vmul.f32 %v367, %v377
    %387 = vset.pattern.permute.xlu0 0
    %388 = vperm.xlu0 %387, %v385
    %v389 = vpop.permute.xlu0 %388
    %v391 = vmul.f32 %v389, %v305
    %v392 = vadd.f32 %v384, %v391
    %v393 = vmul.f32 %v370, %v377
    %395 = vset.pattern.permute.xlu0 0
    %396 = vperm.xlu0 %395, %v393
    %v397 = vpop.permute.xlu0 %396
    %v399 = vmul.f32 %v397, %v308
    %v400 = vadd.f32 %v392, %v399
    %v401 = vmul.f32 %v373, %v377
    %403 = vset.pattern.permute.xlu0 0
    %404 = vperm.xlu0 %403, %v401
    %v405 = vpop.permute.xlu0 %404
    %v407 = vmul.f32 %v405, %v313
    %v408 = vadd.f32 %v400, %v407
    %v409 = vpack.c.bf16 %v408, %v408
    %v410 = vld [vmem:[%s1] sm:$0xff]
    %v411 = vpack.c.bf16 %v410, %v410
    %v412 = vld [vmem:[%s9] sm:$0xf]
    %v413 = vld [vmem:[%s9 + $0x4] sm:$0xf]
    %v414 = vld [vmem:[%s9 + $0x8] sm:$0xf]
    %v415 = vld [vmem:[%s9 + $0xc] sm:$0xf]
    %v416 = vld [vmem:[%s9 + $0x10] sm:$0xf]
    %v417 = vld [vmem:[%s9 + $0x14] sm:$0xf]
    %v418 = vld [vmem:[%s9 + $0x18] sm:$0xf]
    %v419 = vld [vmem:[%s9 + $0x1c] sm:$0xf]
    %v420 = vld [vmem:[%s9 + $0x20] sm:$0xf]
    %v421 = vld [vmem:[%s9 + $0x24] sm:$0xf]
    %v422 = vld [vmem:[%s9 + $0x28] sm:$0xf]
    %v423 = vld [vmem:[%s9 + $0x2c] sm:$0xf]
    %v424 = vld [vmem:[%s9 + $0x30] sm:$0xf]
    %v425 = vld [vmem:[%s9 + $0x34] sm:$0xf]
    %v426 = vld [vmem:[%s9 + $0x38] sm:$0xf]
    %v427 = vld [vmem:[%s9 + $0x3c] sm:$0xf]
    %v428 = vld [vmem:[%s9 + $0x40] sm:$0xf]
    %v429 = vld [vmem:[%s9 + $0x44] sm:$0xf]
    %v430 = vld [vmem:[%s9 + $0x48] sm:$0xf]
    %v431 = vld [vmem:[%s9 + $0x4c] sm:$0xf]
    %v432 = vld [vmem:[%s9 + $0x50] sm:$0xf]
    %v433 = vld [vmem:[%s9 + $0x54] sm:$0xf]
    %v434 = vld [vmem:[%s9 + $0x58] sm:$0xf]
    %v435 = vld [vmem:[%s9 + $0x5c] sm:$0xf]
    %v436 = vld [vmem:[%s9 + $0x60] sm:$0xf]
    %v437 = vld [vmem:[%s9 + $0x64] sm:$0xf]
    %v438 = vld [vmem:[%s9 + $0x68] sm:$0xf]
    %v439 = vld [vmem:[%s9 + $0x6c] sm:$0xf]
    %v440 = vld [vmem:[%s9 + $0x70] sm:$0xf]
    %v441 = vld [vmem:[%s9 + $0x74] sm:$0xf]
    %v442 = vld [vmem:[%s9 + $0x78] sm:$0xf]
    %v443 = vld [vmem:[%s9 + $0x7c] sm:$0xf]
    %v444 = vld [vmem:[%s9 + $0x80] sm:$0xf]
    %v445 = vld [vmem:[%s9 + $0x84] sm:$0xf]
    %v446 = vld [vmem:[%s9 + $0x88] sm:$0xf]
    %v447 = vld [vmem:[%s9 + $0x8c] sm:$0xf]
    %v448 = vld [vmem:[%s9 + $0x90] sm:$0xf]
    %v449 = vld [vmem:[%s9 + $0x94] sm:$0xf]
    %v450 = vld [vmem:[%s9 + $0x98] sm:$0xf]
    %v451 = vld [vmem:[%s9 + $0x9c] sm:$0xf]
    %v452 = vld [vmem:[%s9 + $0xa0] sm:$0xf]
    %v453 = vld [vmem:[%s9 + $0xa4] sm:$0xf]
    %v454 = vld [vmem:[%s9 + $0xa8] sm:$0xf]
    %v455 = vld [vmem:[%s9 + $0xac] sm:$0xf]
    %v456 = vld [vmem:[%s9 + $0xb0] sm:$0xf]
    %v457 = vld [vmem:[%s9 + $0xb4] sm:$0xf]
    %v458 = vld [vmem:[%s9 + $0xb8] sm:$0xf]
    %v459 = vld [vmem:[%s9 + $0xbc] sm:$0xf]
    %v460 = vld [vmem:[%s10] sm:$0x1]
    %v462 = vlaneseq
    %v463 = vshrl.u32 %v462, 7
    %v464 = vsub.s32 0, %v463
    %v465 = vrot.slane %v460, %v464
    %v515 = vunpack.c.l.b16 %v412
    %v516 = vunpack.c.l.b16 %v413
    %v517 = vunpack.c.l.b16 %v414
    %v518 = vunpack.c.l.b16 %v415
    %v519 = vunpack.c.l.b16 %v416
    %v520 = vunpack.c.l.b16 %v417
    %v521 = vunpack.c.l.b16 %v418
    %v522 = vunpack.c.l.b16 %v419
    %v523 = vunpack.c.l.b16 %v420
    %v524 = vunpack.c.l.b16 %v421
    %v525 = vunpack.c.l.b16 %v422
    %v526 = vunpack.c.l.b16 %v423
    %v527 = vunpack.c.l.b16 %v424
    %v528 = vunpack.c.l.b16 %v425
    %v529 = vunpack.c.l.b16 %v426
    %v530 = vunpack.c.l.b16 %v427
    %v531 = vunpack.c.l.b16 %v428
    %v532 = vunpack.c.l.b16 %v429
    %v533 = vunpack.c.l.b16 %v430
    %v534 = vunpack.c.l.b16 %v431
    %v535 = vunpack.c.l.b16 %v432
    %v536 = vunpack.c.l.b16 %v433
    %v537 = vunpack.c.l.b16 %v434
    %v538 = vunpack.c.l.b16 %v435
    %v539 = vunpack.c.l.b16 %v436
    %v540 = vunpack.c.l.b16 %v437
    %v541 = vunpack.c.l.b16 %v438
    %v542 = vunpack.c.l.b16 %v439
    %v543 = vunpack.c.l.b16 %v440
    %v544 = vunpack.c.l.b16 %v441
    %v545 = vunpack.c.l.b16 %v442
    %v546 = vunpack.c.l.b16 %v443
    %v547 = vunpack.c.l.b16 %v444
    %v548 = vunpack.c.l.b16 %v445
    %v549 = vunpack.c.l.b16 %v446
    %v550 = vunpack.c.l.b16 %v447
    %v551 = vunpack.c.l.b16 %v448
    %v552 = vunpack.c.l.b16 %v449
    %v553 = vunpack.c.l.b16 %v450
    %v554 = vunpack.c.l.b16 %v451
    %v555 = vunpack.c.l.b16 %v452
    %v556 = vunpack.c.l.b16 %v453
    %v557 = vunpack.c.l.b16 %v454
    %v558 = vunpack.c.l.b16 %v455
    %v559 = vunpack.c.l.b16 %v456
    %v560 = vunpack.c.l.b16 %v457
    %v561 = vunpack.c.l.b16 %v458
    %v562 = vunpack.c.l.b16 %v459
    %v563 = vpack.c.b16 %v516, %v515
    %v564 = vpack.c.b16 %v518, %v517
    %v565 = vpack.c.b16 %v520, %v519
    %v566 = vpack.c.b16 %v522, %v521
    %v567 = vpack.c.b16 %v524, %v523
    %v568 = vpack.c.b16 %v526, %v525
    %v569 = vpack.c.b16 %v528, %v527
    %v570 = vpack.c.b16 %v530, %v529
    %v571 = vpack.c.b16 %v532, %v531
    %v572 = vpack.c.b16 %v534, %v533
    %v573 = vpack.c.b16 %v536, %v535
    %v574 = vpack.c.b16 %v538, %v537
    %v575 = vpack.c.b16 %v540, %v539
    %v576 = vpack.c.b16 %v542, %v541
    %v577 = vpack.c.b16 %v544, %v543
    %v578 = vpack.c.b16 %v546, %v545
    %v579 = vpack.c.b16 %v548, %v547
    %v580 = vpack.c.b16 %v550, %v549
    %v581 = vpack.c.b16 %v552, %v551
    %v582 = vpack.c.b16 %v554, %v553
    %v583 = vpack.c.b16 %v556, %v555
    %v584 = vpack.c.b16 %v558, %v557
    %v585 = vpack.c.b16 %v560, %v559
    %v586 = vpack.c.b16 %v562, %v561
    %611 = vmatprep.subr.bf16.mxu0 0
    %612 = vmatpush1.bf16.msra.mxu0 %v563
    %613 = vmatprep.subr.bf16.mxu0 0
    %614 = vmatpush1.bf16.msra.mxu0 %v564
    %615 = vmatprep.subr.bf16.mxu0 0
    %616 = vmatpush1.bf16.msra.mxu0 %v565
    %617 = vmatprep.subr.bf16.mxu0 0
    %618 = vmatpush1.bf16.msra.mxu0 %v566
    %619 = vmatprep.subr.bf16.mxu0 0
    %620 = vmatpush1.bf16.msra.mxu0 %v567
    %621 = vmatprep.subr.bf16.mxu0 0
    %622 = vmatpush1.bf16.msra.mxu0 %v568
    %623 = vmatprep.subr.bf16.mxu0 0
    %624 = vmatpush1.bf16.msra.mxu0 %v569
    %625 = vmatprep.subr.bf16.mxu0 0
    %626 = vmatpush1.bf16.msra.mxu0 %v570
    %627 = vmatprep.subr.bf16.mxu0 0
    %628 = vmatpush1.bf16.msra.mxu0 %v571
    %629 = vmatprep.subr.bf16.mxu0 0
    %630 = vmatpush1.bf16.msra.mxu0 %v572
    %631 = vmatprep.subr.bf16.mxu0 0
    %632 = vmatpush1.bf16.msra.mxu0 %v573
    %633 = vmatprep.subr.bf16.mxu0 0
    %634 = vmatpush1.bf16.msra.mxu0 %v574
    %635 = vmatprep.subr.bf16.mxu0 0
    %636 = vmatpush1.bf16.msra.mxu0 %v575
    %637 = vmatprep.subr.bf16.mxu0 0
    %638 = vmatpush1.bf16.msra.mxu0 %v576
    %639 = vmatprep.subr.bf16.mxu0 0
    %640 = vmatpush1.bf16.msra.mxu0 %v577
    %641 = vmatprep.subr.bf16.mxu0 0
    %642 = vmatpush1.bf16.msra.mxu0 %v578
    %643 = vmatprep.mubr.bf16.mxu0 %v409
    %644 = vmatmul.mubr.bf16.gmra.mrb[0].mxu0 %v53
    %v645 = vpop.f32.mrb[0].mxu0
    %v646 = vadd.f32 %v465, %v645
    %v647 = vpop.f32.mrb[0].mxu0
    %v648 = vpop.f32.mrb[0].mxu0
    %v649 = vpop.f32.mrb[0].mxu0
    %650 = vdwg.mxu0
    %651 = vmatprep.subr.bf16.mxu0 0
    %652 = vmatpush1.bf16.msra.mxu0 %v579
    %653 = vmatprep.subr.bf16.mxu0 0
    %654 = vmatpush1.bf16.msra.mxu0 %v580
    %655 = vmatprep.subr.bf16.mxu0 0
    %656 = vmatpush1.bf16.msra.mxu0 %v581
    %657 = vmatprep.subr.bf16.mxu0 0
    %658 = vmatpush1.bf16.msra.mxu0 %v582
    %659 = vmatprep.subr.bf16.mxu0 0
    %660 = vmatpush1.bf16.msra.mxu0 %v583
    %661 = vmatprep.subr.bf16.mxu0 0
    %662 = vmatpush1.bf16.msra.mxu0 %v584
    %663 = vmatprep.subr.bf16.mxu0 0
    %664 = vmatpush1.bf16.msra.mxu0 %v585
    %665 = vmatprep.subr.bf16.mxu0 0
    %666 = vmatpush1.bf16.msra.mxu0 %v586
    %667 = vmatprep.subr.bf16.mxu0 0
    %668 = vmatpush1.bf16.msra.mxu0 0
    %669 = vmatprep.subr.bf16.mxu0 0
    %670 = vmatpush1.bf16.msra.mxu0 0
    %671 = vmatprep.subr.bf16.mxu0 0
    %672 = vmatpush1.bf16.msra.mxu0 0
    %673 = vmatprep.subr.bf16.mxu0 0
    %674 = vmatpush1.bf16.msra.mxu0 0
    %675 = vmatprep.subr.bf16.mxu0 0
    %676 = vmatpush1.bf16.msra.mxu0 0
    %677 = vmatprep.subr.bf16.mxu0 0
    %678 = vmatpush1.bf16.msra.mxu0 0
    %679 = vmatprep.subr.bf16.mxu0 0
    %680 = vmatpush1.bf16.msra.mxu0 0
    %681 = vmatprep.subr.bf16.mxu0 0
    %682 = vmatpush1.bf16.msra.mxu0 0
    %683 = vmatprep.mubr.bf16.mxu0 0
    %684 = vmatmul.mubr.bf16.gmra.mrb[0].mxu0 %v411
    %v685 = vpop.f32.mrb[0].mxu0
    %v686 = vadd.f32 %v646, %v685
    %v687 = vpop.f32.mrb[0].mxu0
    %v688 = vpop.f32.mrb[0].mxu0
    %v689 = vpop.f32.mrb[0].mxu0
    %690 = vdwg.mxu0
    %v691 = vmax.f32 %v686, 0.0
    %v692 = vpack.c.bf16 %v691, %v691
    %v693 = vld [vmem:[%s11] sm:$0xf]
    %v694 = vld [vmem:[%s11 + $0x4] sm:$0xf]
    %v695 = vld [vmem:[%s11 + $0x8] sm:$0xf]
    %v696 = vld [vmem:[%s11 + $0xc] sm:$0xf]
    %v697 = vld [vmem:[%s11 + $0x10] sm:$0xf]
    %v698 = vld [vmem:[%s11 + $0x14] sm:$0xf]
    %v699 = vld [vmem:[%s11 + $0x18] sm:$0xf]
    %v700 = vld [vmem:[%s11 + $0x1c] sm:$0xf]
    %v701 = vld [vmem:[%s11 + $0x20] sm:$0xf]
    %v702 = vld [vmem:[%s11 + $0x24] sm:$0xf]
    %v703 = vld [vmem:[%s11 + $0x28] sm:$0xf]
    %v704 = vld [vmem:[%s11 + $0x2c] sm:$0xf]
    %v705 = vld [vmem:[%s11 + $0x30] sm:$0xf]
    %v706 = vld [vmem:[%s11 + $0x34] sm:$0xf]
    %v707 = vld [vmem:[%s11 + $0x38] sm:$0xf]
    %v708 = vld [vmem:[%s11 + $0x3c] sm:$0xf]
    %v709 = vld [vmem:[%s12] sm:$0x1]
    %v711 = vlaneseq
    %v712 = vshrl.u32 %v711, 7
    %v713 = vsub.s32 0, %v712
    %v714 = vrot.slane %v709, %v713
    %v732 = vunpack.c.l.b16 %v693
    %v733 = vunpack.c.l.b16 %v694
    %v734 = vunpack.c.l.b16 %v695
    %v735 = vunpack.c.l.b16 %v696
    %v736 = vunpack.c.l.b16 %v697
    %v737 = vunpack.c.l.b16 %v698
    %v738 = vunpack.c.l.b16 %v699
    %v739 = vunpack.c.l.b16 %v700
    %v740 = vunpack.c.l.b16 %v701
    %v741 = vunpack.c.l.b16 %v702
    %v742 = vunpack.c.l.b16 %v703
    %v743 = vunpack.c.l.b16 %v704
    %v744 = vunpack.c.l.b16 %v705
    %v745 = vunpack.c.l.b16 %v706
    %v746 = vunpack.c.l.b16 %v707
    %v747 = vunpack.c.l.b16 %v708
    %v748 = vpack.c.b16 %v733, %v732
    %v749 = vpack.c.b16 %v735, %v734
    %v750 = vpack.c.b16 %v737, %v736
    %v751 = vpack.c.b16 %v739, %v738
    %v752 = vpack.c.b16 %v741, %v740
    %v753 = vpack.c.b16 %v743, %v742
    %v754 = vpack.c.b16 %v745, %v744
    %v755 = vpack.c.b16 %v747, %v746
    %764 = vmatprep.subr.bf16.mxu0 0
    %765 = vmatpush1.bf16.msra.mxu0 %v748
    %766 = vmatprep.subr.bf16.mxu0 0
    %767 = vmatpush1.bf16.msra.mxu0 %v749
    %768 = vmatprep.subr.bf16.mxu0 0
    %769 = vmatpush1.bf16.msra.mxu0 %v750
    %770 = vmatprep.subr.bf16.mxu0 0
    %771 = vmatpush1.bf16.msra.mxu0 %v751
    %772 = vmatprep.subr.bf16.mxu0 0
    %773 = vmatpush1.bf16.msra.mxu0 %v752
    %774 = vmatprep.subr.bf16.mxu0 0
    %775 = vmatpush1.bf16.msra.mxu0 %v753
    %776 = vmatprep.subr.bf16.mxu0 0
    %777 = vmatpush1.bf16.msra.mxu0 %v754
    %778 = vmatprep.subr.bf16.mxu0 0
    %779 = vmatpush1.bf16.msra.mxu0 %v755
    %780 = vmatprep.subr.bf16.mxu0 0
    %781 = vmatpush1.bf16.msra.mxu0 0
    %782 = vmatprep.subr.bf16.mxu0 0
    %783 = vmatpush1.bf16.msra.mxu0 0
    %784 = vmatprep.subr.bf16.mxu0 0
    %785 = vmatpush1.bf16.msra.mxu0 0
    %786 = vmatprep.subr.bf16.mxu0 0
    %787 = vmatpush1.bf16.msra.mxu0 0
    %788 = vmatprep.subr.bf16.mxu0 0
    %789 = vmatpush1.bf16.msra.mxu0 0
    %790 = vmatprep.subr.bf16.mxu0 0
    %791 = vmatpush1.bf16.msra.mxu0 0
    %792 = vmatprep.subr.bf16.mxu0 0
    %793 = vmatpush1.bf16.msra.mxu0 0
    %794 = vmatprep.subr.bf16.mxu0 0
    %795 = vmatpush1.bf16.msra.mxu0 0
    %796 = vmatprep.mubr.bf16.mxu0 0
    %797 = vmatmul.mubr.bf16.gmra.mrb[0].mxu0 %v692
    %v798 = vpop.f32.mrb[0].mxu0
    %v799 = vadd.f32 %v714, %v798
    %v800 = vpop.f32.mrb[0].mxu0
    %v801 = vpop.f32.mrb[0].mxu0
    %v802 = vpop.f32.mrb[0].mxu0
    %803 = vdwg.mxu0
    %804 = vst [vmem:[#allocation3] sm:$0xff] %v799
    // Predicated region
    $region54: #{forward.7} parent=1 // pred_check
      _
    $region55: #{forward.7} parent=1 // pred_check_branch
      %806 = sbr.rel (0) target = $region57
    $region56: #{forward.7} parent=1 // pred_region
      %s808 = ssub.s32 128, 128
      %809 = vsyncadd [#allocation4], %s808
      %s811 = sshll.u32 [#allocation3], 4
      %s812 = int_to_ptr.vmem [resolvable:$true] %s811
      %814 = dma.vmem_to_hbm [thread:$0]  %s812, 128, %s13, [#allocation4]
    $region57: #{forward.7} parent=1 // pred_fallthru
      _
    // Predicated region
    $region58: #{forward.7} parent=1 // pred_check
      _
    $region59: #{forward.7} parent=1 // pred_check_branch
      %816 = sbr.rel (0) target = $region61
    $region60: #{forward.7} parent=1 // pred_region
      %817 = dma.done [#allocation4], 128
    $region61: #{forward.7} parent=1 // pred_fallthru
      _
    %818 = vsyncpa [#allocation4], 1

</llo_original>
